<compile_context>
chip_gen: v5e
topology: v5e:2x2
jax: 0.10.0
libtpu: 0.0.40
codegen_flags: <defaults>
</compile_context>

<pallas_src>
import jax
import jax.numpy as jnp
from jax import lax
from jax.experimental import pallas as pl
from jax.experimental.pallas import tpu as pltpu


# ------------------------------------ kernel ---------------------------------------

def _make_fused_kernel(st_cins, out_ch, cm, t_in, t_out, v, bsz, n_txp):
    tv = t_in * v
    rows_st = bsz * out_ch          # rows of the ST/TCN-input activations: (b, o)
    rows_cm = bsz * cm              # rows of the TCN-output / TXC activations: (b, c)

    def kernel(*refs):
        x_ref, abd_ref = refs[0], refs[1]
        out_ref = refs[-1]
        idx = 2

        a_bd = abd_ref[...]                                   # (T*V, T*V) block-diag A
        h = x_ref[0]                                          # (B*C_in, T*V), rows=(b,c)

        # -------- ST-GCNN stack: rows = (b, channel), lanes = (t, v) = 128 ----------
        for cin in st_cins:
            w_bd = refs[idx][...]; b_col = refs[idx + 1][...]; sh_col = refs[idx + 2][...]
            idx += 3
            if cin != out_ch:                                 # 1x1 conv + BN residual
                rw_bd = refs[idx][...]; r_col = refs[idx + 1][...]
                idx += 2
                res = jnp.dot(rw_bd, h, preferred_element_type=jnp.float32) + r_col
            else:                                             # identity residual
                res = h
            y = jnp.dot(w_bd, h, preferred_element_type=jnp.float32) + b_col   # 1x1 conv
            z = jnp.dot(y, a_bd, preferred_element_type=jnp.float32) + sh_col  # graph conv + BN shift
            z = jnp.maximum(z, 0.0)                           # block: BN -> ReLU -> Dropout(id)
            h = jnp.maximum(z + res, 0.0)                     # + residual, ReLU

        # -------- TCN: Conv2d(O, Cm, (3,1), pad (1,0)) + BN + ReLU -------------------
        wt_ref = refs[idx]; bt_col = refs[idx + 1][...]       # wt_ref: (3, B*Cm, B*O)
        idx += 2
        zlane = jnp.zeros((rows_st, v), jnp.float32)
        h_prev = jnp.concatenate([zlane, h[:, :tv - v]], axis=1)    # h at t-1 (zero pad)
        h_next = jnp.concatenate([h[:, v:], zlane], axis=1)         # h at t+1 (zero pad)
        tcn = (jnp.dot(wt_ref[0], h_prev, preferred_element_type=jnp.float32)
               + jnp.dot(wt_ref[1], h, preferred_element_type=jnp.float32)
               + jnp.dot(wt_ref[2], h_next, preferred_element_type=jnp.float32)
               + bt_col)
        xt = jnp.maximum(tcn, 0.0)                            # (B*Cm, T*V), rows=(b,c)

        # -------- TXC stack: 3x3 conv over (c, v), T_in->T_out via constant matmuls --
        # Row masks for the +/-1 shift over c (also blocks cross-batch leakage); hoisted
        # once and reused by all TXC layers.
        ridx = lax.broadcasted_iota(jnp.int32, (rows_cm, 1), 0)
        cpos = ridx % cm
        mask_up = (cpos != (cm - 1)).astype(jnp.float32)      # row may read c+1
        mask_dn = (cpos != 0).astype(jnp.float32)             # row may read c-1

        for j in range(n_txp):
            m_ref = refs[idx]; b_row = refs[idx + 1][...]     # m_ref: (3, Ti*V, To*V)
            idx += 2
            # Inplace ReLU in PyTorch aliases x, so the residual adds relu(x).
            src = xt if j == 0 else jnp.maximum(xt, 0.0)
            lanes = src.shape[1]
            zrow = jnp.zeros((1, lanes), jnp.float32)
            src_up = jnp.concatenate([src[1:, :], zrow], axis=0) * mask_up    # c+1
            src_dn = jnp.concatenate([zrow, src[:-1, :]], axis=0) * mask_dn   # c-1
            conv = (jnp.dot(src_dn, m_ref[0], preferred_element_type=jnp.float32)
                    + jnp.dot(src, m_ref[1], preferred_element_type=jnp.float32)
                    + jnp.dot(src_up, m_ref[2], preferred_element_type=jnp.float32)
                    + b_row)
            xt = conv if j == 0 else conv + src

        out_ref[0] = xt                                       # (B*Cm, T_out*V) lane-dense

    return kernel


# ------------------------------------ wrapper ---------------------------------------

def _bn_fold(bn, eps=1e-5):
    sc = bn["gamma"] / jnp.sqrt(bn["var"] + eps)
    sh = bn["beta"] - bn["mean"] * sc
    return sc, sh


def _pick_batch_block(n, out_ch):
    """Largest divisor B of n with B*out_ch <= 128 (keeps matmul rows within one MXU pass)."""
    max_b = max(1, 128 // max(out_ch, 1))
    best = 1
    for b in range(1, min(n, max_b) + 1):
        if n % b == 0:
            best = b
    return best


def _txc_weight(w, sc, vdim):
    """Build the banded constant matrices M_kh for one TXC layer.

    M_kh[(ti, v'), (to, v)] = sc[to] * W[to, ti, kh, (v'-v)+1]   if |v'-v| <= 1 else 0
    so that   out[(b,c), (to,v)] = sum_kh  H_{kh-1} @ M_kh       (H shifted over c by kh-1)
    reproduces Conv2d(T_in, T_out, 3x3, pad=1) over the (c, v) plane + folded BN scale.
    """
    t_out, t_in = w.shape[0], w.shape[1]
    scw = sc[:, None, None, None] * w                         # (To, Ti, 3, 3)
    dvm = jnp.arange(vdim)[:, None] - jnp.arange(vdim)[None, :]   # v' - v
    band = (jnp.abs(dvm) <= 1).astype(jnp.float32)
    kw_idx = jnp.clip(dvm + 1, 0, 2)
    mats = []
    for kh in range(3):
        wk = scw[:, :, kh, :]                                 # (To, Ti, 3)
        m = wk[:, :, kw_idx] * band[None, None, :, :]         # (To, Ti, V', V)
        m = jnp.transpose(m, (1, 2, 0, 3)).reshape(t_in * vdim, t_out * vdim)
        mats.append(m)
    return jnp.stack(mats, axis=0)                            # (3, Ti*V, To*V)


def social_stgcnn_forward(params, x, a):
    n, c_in0, t_in, vdim = x.shape
    tv = t_in * vdim
    st = params["st_gcnns"]
    out_ch = st[0]["w"].shape[0]
    cm = params["tcn"]["w"].shape[0]
    t_out = params["txp_cnns"][0]["w"].shape[0]
    n_txp = len(params["txp_cnns"])

    bsz = _pick_batch_block(n, out_ch)
    n_blk = n // bsz
    eye_b = jnp.eye(bsz, dtype=jnp.float32)

    # Block-diagonal adjacency: A_bd[(t,v),(s,w)] = A[t,v,w] * delta(t,s)
    a_bd = (a[:, :, None, :] *
            jnp.eye(t_in, dtype=a.dtype)[:, None, :, None]).reshape(tv, tv)

    # Batch-blocked input: rows within a block are (b_local, channel).
    args = [x.reshape(n_blk, bsz * c_in0, tv), a_bd]

    st_cins = []
    for p in st:
        cin = p["w"].shape[1]
        st_cins.append(cin)
        sc, sh = _bn_fold(p["bn"])
        args += [jnp.kron(eye_b, sc[:, None] * p["w"]),               # (B*O, B*Ci) block-diag
                 jnp.tile(sc * p["b"], bsz)[:, None],                 # (B*O, 1)
                 jnp.tile(sh, bsz)[:, None]]                          # (B*O, 1)
        if cin != out_ch:
            rsc, rsh = _bn_fold(p["rbn"])
            args += [jnp.kron(eye_b, rsc[:, None] * p["rw"]),
                     jnp.tile(rsc * p["rb"] + rsh, bsz)[:, None]]

    pt = params["tcn"]
    sc, sh = _bn_fold(pt["bn"])
    wt = jnp.stack([jnp.kron(eye_b, sc[:, None] * pt["w"][:, :, kt]) for kt in range(3)],
                   axis=0)                                            # (3, B*Cm, B*O)
    args += [wt, jnp.tile(sc * pt["b"] + sh, bsz)[:, None]]

    for p in params["txp_cnns"]:
        sc, sh = _bn_fold(p["bn"])
        args += [_txc_weight(p["w"], sc, vdim),
                 jnp.repeat(sc * p["b"] + sh, vdim)[None, :]]         # (1, To*V)

    def _const_spec(arr):
        nd = arr.ndim
        return pl.BlockSpec(arr.shape, lambda i, _nd=nd: (0,) * _nd)

    in_specs = [pl.BlockSpec((1, bsz * c_in0, tv), lambda i: (i, 0, 0))]
    in_specs += [_const_spec(arr) for arr in args[1:]]

    out = pl.pallas_call(
        _make_fused_kernel(tuple(st_cins), out_ch, cm, t_in, t_out, vdim, bsz, n_txp),
        grid=(n_blk,),
        in_specs=in_specs,
        out_specs=pl.BlockSpec((1, bsz * cm, t_out * vdim), lambda i: (i, 0, 0)),
        out_shape=jax.ShapeDtypeStruct((n_blk, bsz * cm, t_out * vdim), jnp.float32),
        compiler_params=pltpu.CompilerParams(dimension_semantics=("parallel",)),
    )(*args)
    # Free wrapper-side layout plumbing: (N//B, B*Cm, To*V) -> (N, To, Cm, V)
    return out.reshape(n, cm, t_out, vdim).transpose(0, 2, 1, 3)


# --------------------------- pure-JAX reference (checking) ---------------------------

def _reference_forward(params, x, a, eps=1e-5):
    hp = lax.Precision.HIGHEST

    def bn4(z, p):
        sc = p["gamma"] / jnp.sqrt(p["var"] + eps)
        sh = p["beta"] - p["mean"] * sc
        return z * sc[None, :, None, None] + sh[None, :, None, None]

    h = x
    for p in params["st_gcnns"]:
        if "rw" in p:
            res = jnp.einsum("oc,nctv->notv", p["rw"], h, precision=hp) \
                + p["rb"][None, :, None, None]
            res = bn4(res, p["rbn"])
        else:
            res = h
        y = jnp.einsum("oc,nctv->notv", p["w"], h, precision=hp) \
            + p["b"][None, :, None, None]
        z = jnp.einsum("notv,tvw->notw", y, a, precision=hp)
        z = jax.nn.relu(bn4(z, p["bn"]))
        h = jax.nn.relu(z + res)

    pt = params["tcn"]
    t_frames = h.shape[2]
    hpad = jnp.pad(h, ((0, 0), (0, 0), (1, 1), (0, 0)))
    tcn = sum(jnp.einsum("mo,notv->nmtv", pt["w"][:, :, kt],
                         hpad[:, :, kt:kt + t_frames, :], precision=hp)
              for kt in range(3)) + pt["b"][None, :, None, None]
    tcn = jax.nn.relu(bn4(tcn, pt["bn"]))

    z = jnp.transpose(tcn, (0, 2, 1, 3))                      # (N, T, C, V)

    def txc(p, u):
        c, v = u.shape[2], u.shape[3]
        up = jnp.pad(u, ((0, 0), (0, 0), (1, 1), (1, 1)))
        o = sum(jnp.einsum("ui,nicv->nucv", p["w"][:, :, kh, kw],
                           up[:, :, kh:kh + c, kw:kw + v], precision=hp)
                for kh in range(3) for kw in range(3)) + p["b"][None, :, None, None]
        return bn4(o, p["bn"])

    z = txc(params["txp_cnns"][0], z)
    for p in params["txp_cnns"][1:]:
        act = jax.nn.relu(z)
        z = txc(p, act) + act
    return z


# --------------------------------- parameter init ------------------------------------

def _init_bn(key, c):
    k1, k2, k3, k4 = jax.random.split(key, 4)
    return dict(gamma=1.0 + 0.1 * jax.random.normal(k1, (c,), jnp.float32),
                beta=0.1 * jax.random.normal(k2, (c,), jnp.float32),
                mean=0.1 * jax.random.normal(k3, (c,), jnp.float32),
                var=1.0 + 0.1 * jnp.abs(jax.random.normal(k4, (c,), jnp.float32)))


def init_params(key, n_st, n_txp, cin, cout, tin, tout):
    params = {"st_gcnns": [], "txp_cnns": []}
    for k in range(n_st):
        key, k1, k2, k3, k4, k5, k6 = jax.random.split(key, 7)
        ic = cin if k == 0 else cout
        p = dict(w=0.2 * jax.random.normal(k1, (cout, ic), jnp.float32),   # 1x1 conv
                 b=0.1 * jax.random.normal(k2, (cout,), jnp.float32),
                 bn=_init_bn(k3, cout))
        if ic != cout:                                                     # residual conv + BN
            p["rw"] = 0.2 * jax.random.normal(k4, (cout, ic), jnp.float32)
            p["rb"] = 0.1 * jax.random.normal(k5, (cout,), jnp.float32)
            p["rbn"] = _init_bn(k6, cout)
        params["st_gcnns"].append(p)
    key, k1, k2, k3 = jax.random.split(key, 4)
    params["tcn"] = dict(w=0.2 * jax.random.normal(k1, (cin, cout, 3), jnp.float32),  # (m, o, kt)
                         b=0.1 * jax.random.normal(k2, (cin,), jnp.float32),
                         bn=_init_bn(k3, cin))
    for i in range(n_txp):
        key, k1, k2, k3 = jax.random.split(key, 4)
        ti = tin if i == 0 else tout
        params["txp_cnns"].append(dict(
            w=0.2 * jax.random.normal(k1, (tout, ti, 3, 3), jnp.float32),  # (to, ti, kh, kw)
            b=0.1 * jax.random.normal(k2, (tout,), jnp.float32),
            bn=_init_bn(k3, tout)))
    return params


# -------------------------------------- main -----------------------------------------

if __name__ == "__main__":
    N, V = 2, 16
    input_channels, output_channels = 2, 16
    input_time_frame, output_time_frame = 8, 10
    # einsum('nctv,tvw->nctw') plus the model asserts force A.shape[0] == T_in,
    # so temporal_kernel_size == input_time_frame.
    temporal_kernel_size = input_time_frame
    n_st_gcnn_layers, n_txpcnn_layers = 2, 3

    key = jax.random.PRNGKey(0)
    kx, ka, kp = jax.random.split(key, 3)
    x = jax.random.normal(kx, (N, input_channels, input_time_frame, V), jnp.float32)
    a = jax.random.normal(ka, (temporal_kernel_size, V, V), jnp.float32)
    params = init_params(kp, n_st_gcnn_layers, n_txpcnn_layers,
                         input_channels, output_channels,
                         input_time_frame, output_time_frame)

    out = jax.jit(social_stgcnn_forward)(params, x, a)
    out = jax.block_until_ready(out)
    assert out.shape == (N, output_time_frame, input_channels, V), out.shape
    assert bool(jnp.all(jnp.isfinite(out)))

    ref = _reference_forward(params, x, a)
    err = float(jnp.max(jnp.abs(out - ref)) / (jnp.max(jnp.abs(ref)) + 1e-6))
    assert err < 1e-3, f"mismatch vs reference: rel-max err {err}"
    print("KERNEL_OK")
</pallas_src>

<mosaic_0001>
module attributes {stable_mosaic.version = 11 : i64} {
  func.func @kernel(%arg0: i32, %arg1: memref<1x4x128xf32, #tpu.memory_space<vmem>>, %arg2: memref<128x128xf32, #tpu.memory_space<vmem>>, %arg3: memref<32x4xf32, #tpu.memory_space<vmem>>, %arg4: memref<32x1xf32, #tpu.memory_space<vmem>>, %arg5: memref<32x1xf32, #tpu.memory_space<vmem>>, %arg6: memref<32x4xf32, #tpu.memory_space<vmem>>, %arg7: memref<32x1xf32, #tpu.memory_space<vmem>>, %arg8: memref<32x32xf32, #tpu.memory_space<vmem>>, %arg9: memref<32x1xf32, #tpu.memory_space<vmem>>, %arg10: memref<32x1xf32, #tpu.memory_space<vmem>>, %arg11: memref<3x4x32xf32, #tpu.memory_space<vmem>>, %arg12: memref<4x1xf32, #tpu.memory_space<vmem>>, %arg13: memref<3x128x160xf32, #tpu.memory_space<vmem>>, %arg14: memref<1x160xf32, #tpu.memory_space<vmem>>, %arg15: memref<3x160x160xf32, #tpu.memory_space<vmem>>, %arg16: memref<1x160xf32, #tpu.memory_space<vmem>>, %arg17: memref<3x160x160xf32, #tpu.memory_space<vmem>>, %arg18: memref<1x160xf32, #tpu.memory_space<vmem>>, %arg19: memref<1x4x160xf32, #tpu.memory_space<vmem>>) attributes {dimension_semantics = [#tpu.dimension_semantics<parallel>], iteration_bounds = array<i64: 1>, scalar_prefetch = 0 : i64, scratch_operands = 0 : i64, tpu.core_type = #tpu.core_type<tc>, window_params = [{transform_indices = @transform_0, window_bounds = array<i64: 1, 4, 128>}, {pipeline_mode = #tpu.pipeline_mode<synchronous>, transform_indices = @transform_1, window_bounds = array<i64: 128, 128>}, {pipeline_mode = #tpu.pipeline_mode<synchronous>, transform_indices = @transform_2, window_bounds = array<i64: 32, 4>}, {pipeline_mode = #tpu.pipeline_mode<synchronous>, transform_indices = @transform_3, window_bounds = array<i64: 32, 1>}, {pipeline_mode = #tpu.pipeline_mode<synchronous>, transform_indices = @transform_4, window_bounds = array<i64: 32, 1>}, {pipeline_mode = #tpu.pipeline_mode<synchronous>, transform_indices = @transform_5, window_bounds = array<i64: 32, 4>}, {pipeline_mode = #tpu.pipeline_mode<synchronous>, transform_indices = @transform_6, window_bounds = array<i64: 32, 1>}, {pipeline_mode = #tpu.pipeline_mode<synchronous>, transform_indices = @transform_7, window_bounds = array<i64: 32, 32>}, {pipeline_mode = #tpu.pipeline_mode<synchronous>, transform_indices = @transform_8, window_bounds = array<i64: 32, 1>}, {pipeline_mode = #tpu.pipeline_mode<synchronous>, transform_indices = @transform_9, window_bounds = array<i64: 32, 1>}, {pipeline_mode = #tpu.pipeline_mode<synchronous>, transform_indices = @transform_10, window_bounds = array<i64: 3, 4, 32>}, {pipeline_mode = #tpu.pipeline_mode<synchronous>, transform_indices = @transform_11, window_bounds = array<i64: 4, 1>}, {pipeline_mode = #tpu.pipeline_mode<synchronous>, transform_indices = @transform_12, window_bounds = array<i64: 3, 128, 160>}, {pipeline_mode = #tpu.pipeline_mode<synchronous>, transform_indices = @transform_13, window_bounds = array<i64: 1, 160>}, {pipeline_mode = #tpu.pipeline_mode<synchronous>, transform_indices = @transform_14, window_bounds = array<i64: 3, 160, 160>}, {pipeline_mode = #tpu.pipeline_mode<synchronous>, transform_indices = @transform_15, window_bounds = array<i64: 1, 160>}, {pipeline_mode = #tpu.pipeline_mode<synchronous>, transform_indices = @transform_16, window_bounds = array<i64: 3, 160, 160>}, {pipeline_mode = #tpu.pipeline_mode<synchronous>, transform_indices = @transform_17, window_bounds = array<i64: 1, 160>}, {transform_indices = @transform_18, window_bounds = array<i64: 1, 4, 160>}]} {
    %c0 = arith.constant 0 : index
    %c0_0 = arith.constant 0 : index
    %0 = vector.load %arg2[%c0, %c0_0] : memref<128x128xf32, #tpu.memory_space<vmem>>, vector<128x128xf32>
    %c0_1 = arith.constant 0 : index
    %c0_2 = arith.constant 0 : index
    %c0_3 = arith.constant 0 : index
    %1 = vector.load %arg1[%c0_1, %c0_2, %c0_3] : memref<1x4x128xf32, #tpu.memory_space<vmem>>, vector<1x4x128xf32>
    %2 = vector.shape_cast %1 : vector<1x4x128xf32> to vector<4x128xf32>
    %c0_4 = arith.constant 0 : index
    %c0_5 = arith.constant 0 : index
    %3 = vector.load %arg3[%c0_4, %c0_5] : memref<32x4xf32, #tpu.memory_space<vmem>>, vector<32x4xf32>
    %c0_6 = arith.constant 0 : index
    %c0_7 = arith.constant 0 : index
    %4 = vector.load %arg4[%c0_6, %c0_7] : memref<32x1xf32, #tpu.memory_space<vmem>>, vector<32x1xf32>
    %c0_8 = arith.constant 0 : index
    %c0_9 = arith.constant 0 : index
    %5 = vector.load %arg5[%c0_8, %c0_9] : memref<32x1xf32, #tpu.memory_space<vmem>>, vector<32x1xf32>
    %c0_10 = arith.constant 0 : index
    %c0_11 = arith.constant 0 : index
    %6 = vector.load %arg6[%c0_10, %c0_11] : memref<32x4xf32, #tpu.memory_space<vmem>>, vector<32x4xf32>
    %c0_12 = arith.constant 0 : index
    %c0_13 = arith.constant 0 : index
    %7 = vector.load %arg7[%c0_12, %c0_13] : memref<32x1xf32, #tpu.memory_space<vmem>>, vector<32x1xf32>
    %cst = arith.constant dense<0.000000e+00> : vector<32x128xf32>
    %8 = tpu.matmul %6, %2, %cst {dimension_numbers = #tpu.dot_dimension_numbers<[1], [0], [0], [1], [0, 0, 1, 1], [], []>} : vector<32x4xf32>, vector<4x128xf32>, vector<32x128xf32> -> vector<32x128xf32>
    %9 = vector.broadcast %7 : vector<32x1xf32> to vector<32x128xf32>
    %10 = arith.addf %8, %9 : vector<32x128xf32>
    %cst_14 = arith.constant dense<0.000000e+00> : vector<32x128xf32>
    %11 = tpu.matmul %3, %2, %cst_14 {dimension_numbers = #tpu.dot_dimension_numbers<[1], [0], [0], [1], [0, 0, 1, 1], [], []>} : vector<32x4xf32>, vector<4x128xf32>, vector<32x128xf32> -> vector<32x128xf32>
    %12 = vector.broadcast %4 : vector<32x1xf32> to vector<32x128xf32>
    %13 = arith.addf %11, %12 : vector<32x128xf32>
    %cst_15 = arith.constant dense<0.000000e+00> : vector<32x128xf32>
    %14 = tpu.matmul %13, %0, %cst_15 {dimension_numbers = #tpu.dot_dimension_numbers<[1], [0], [0], [1], [0, 0, 1, 1], [], []>} : vector<32x128xf32>, vector<128x128xf32>, vector<32x128xf32> -> vector<32x128xf32>
    %15 = vector.broadcast %5 : vector<32x1xf32> to vector<32x128xf32>
    %16 = arith.addf %14, %15 : vector<32x128xf32>
    %cst_16 = arith.constant 0.000000e+00 : f32
    %17 = vector.broadcast %cst_16 : f32 to vector<32x128xf32>
    %18 = arith.maximumf %16, %17 : vector<32x128xf32>
    %19 = arith.addf %18, %10 : vector<32x128xf32>
    %cst_17 = arith.constant 0.000000e+00 : f32
    %20 = vector.broadcast %cst_17 : f32 to vector<32x128xf32>
    %21 = arith.maximumf %19, %20 : vector<32x128xf32>
    %c0_18 = arith.constant 0 : index
    %c0_19 = arith.constant 0 : index
    %22 = vector.load %arg8[%c0_18, %c0_19] : memref<32x32xf32, #tpu.memory_space<vmem>>, vector<32x32xf32>
    %c0_20 = arith.constant 0 : index
    %c0_21 = arith.constant 0 : index
    %23 = vector.load %arg9[%c0_20, %c0_21] : memref<32x1xf32, #tpu.memory_space<vmem>>, vector<32x1xf32>
    %c0_22 = arith.constant 0 : index
    %c0_23 = arith.constant 0 : index
    %24 = vector.load %arg10[%c0_22, %c0_23] : memref<32x1xf32, #tpu.memory_space<vmem>>, vector<32x1xf32>
    %cst_24 = arith.constant dense<0.000000e+00> : vector<32x128xf32>
    %25 = tpu.matmul %22, %21, %cst_24 {dimension_numbers = #tpu.dot_dimension_numbers<[1], [0], [0], [1], [0, 0, 1, 1], [], []>} : vector<32x32xf32>, vector<32x128xf32>, vector<32x128xf32> -> vector<32x128xf32>
    %26 = vector.broadcast %23 : vector<32x1xf32> to vector<32x128xf32>
    %27 = arith.addf %25, %26 : vector<32x128xf32>
    %cst_25 = arith.constant dense<0.000000e+00> : vector<32x128xf32>
    %28 = tpu.matmul %27, %0, %cst_25 {dimension_numbers = #tpu.dot_dimension_numbers<[1], [0], [0], [1], [0, 0, 1, 1], [], []>} : vector<32x128xf32>, vector<128x128xf32>, vector<32x128xf32> -> vector<32x128xf32>
    %29 = vector.broadcast %24 : vector<32x1xf32> to vector<32x128xf32>
    %30 = arith.addf %28, %29 : vector<32x128xf32>
    %cst_26 = arith.constant 0.000000e+00 : f32
    %31 = vector.broadcast %cst_26 : f32 to vector<32x128xf32>
    %32 = arith.maximumf %30, %31 : vector<32x128xf32>
    %33 = arith.addf %32, %21 : vector<32x128xf32>
    %cst_27 = arith.constant 0.000000e+00 : f32
    %34 = vector.broadcast %cst_27 : f32 to vector<32x128xf32>
    %35 = arith.maximumf %33, %34 : vector<32x128xf32>
    %c0_28 = arith.constant 0 : index
    %c0_29 = arith.constant 0 : index
    %36 = vector.load %arg12[%c0_28, %c0_29] : memref<4x1xf32, #tpu.memory_space<vmem>>, vector<4x1xf32>
    %cst_30 = arith.constant 0.000000e+00 : f32
    %37 = vector.broadcast %cst_30 : f32 to vector<32x16xf32>
    %38 = vector.extract_strided_slice %35 {offsets = [0, 0], sizes = [32, 112], strides = [1, 1]} : vector<32x128xf32> to vector<32x112xf32>
    %39 = tpu.concatenate %37, %38 in 1 : vector<32x16xf32>, vector<32x112xf32> -> vector<32x128xf32>
    %40 = vector.extract_strided_slice %35 {offsets = [0, 16], sizes = [32, 112], strides = [1, 1]} : vector<32x128xf32> to vector<32x112xf32>
    %41 = tpu.concatenate %40, %37 in 1 : vector<32x112xf32>, vector<32x16xf32> -> vector<32x128xf32>
    %c0_31 = arith.constant 0 : index
    %c0_32 = arith.constant 0 : index
    %c0_33 = arith.constant 0 : index
    %42 = vector.load %arg11[%c0_31, %c0_32, %c0_33] : memref<3x4x32xf32, #tpu.memory_space<vmem>>, vector<1x4x32xf32>
    %43 = vector.shape_cast %42 : vector<1x4x32xf32> to vector<4x32xf32>
    %cst_34 = arith.constant dense<0.000000e+00> : vector<4x128xf32>
    %44 = tpu.matmul %43, %39, %cst_34 {dimension_numbers = #tpu.dot_dimension_numbers<[1], [0], [0], [1], [0, 0, 1, 1], [], []>} : vector<4x32xf32>, vector<32x128xf32>, vector<4x128xf32> -> vector<4x128xf32>
    %c1 = arith.constant 1 : index
    %c0_35 = arith.constant 0 : index
    %c0_36 = arith.constant 0 : index
    %45 = vector.load %arg11[%c1, %c0_35, %c0_36] : memref<3x4x32xf32, #tpu.memory_space<vmem>>, vector<1x4x32xf32>
    %46 = vector.shape_cast %45 : vector<1x4x32xf32> to vector<4x32xf32>
    %cst_37 = arith.constant dense<0.000000e+00> : vector<4x128xf32>
    %47 = tpu.matmul %46, %35, %cst_37 {dimension_numbers = #tpu.dot_dimension_numbers<[1], [0], [0], [1], [0, 0, 1, 1], [], []>} : vector<4x32xf32>, vector<32x128xf32>, vector<4x128xf32> -> vector<4x128xf32>
    %48 = arith.addf %44, %47 : vector<4x128xf32>
    %c2 = arith.constant 2 : index
    %c0_38 = arith.constant 0 : index
    %c0_39 = arith.constant 0 : index
    %49 = vector.load %arg11[%c2, %c0_38, %c0_39] : memref<3x4x32xf32, #tpu.memory_space<vmem>>, vector<1x4x32xf32>
    %50 = vector.shape_cast %49 : vector<1x4x32xf32> to vector<4x32xf32>
    %cst_40 = arith.constant dense<0.000000e+00> : vector<4x128xf32>
    %51 = tpu.matmul %50, %41, %cst_40 {dimension_numbers = #tpu.dot_dimension_numbers<[1], [0], [0], [1], [0, 0, 1, 1], [], []>} : vector<4x32xf32>, vector<32x128xf32>, vector<4x128xf32> -> vector<4x128xf32>
    %52 = arith.addf %48, %51 : vector<4x128xf32>
    %53 = vector.broadcast %36 : vector<4x1xf32> to vector<4x128xf32>
    %54 = arith.addf %52, %53 : vector<4x128xf32>
    %cst_41 = arith.constant 0.000000e+00 : f32
    %55 = vector.broadcast %cst_41 : f32 to vector<4x128xf32>
    %56 = arith.maximumf %54, %55 : vector<4x128xf32>
    %57 = tpu.iota {dimensions = array<i32: 0>} : vector<4x1xi32>
    %c2_i32 = arith.constant 2 : i32
    %c0_i32 = arith.constant 0 : i32
    %58 = arith.cmpi eq, %c2_i32, %c0_i32 : i32
    %c1_i32 = arith.constant 1 : i32
    %59 = arith.select %58, %c1_i32, %c2_i32 : i32
    %60 = vector.broadcast %59 : i32 to vector<4x1xi32>
    %61 = arith.remsi %57, %60 : vector<4x1xi32>
    %c0_i32_42 = arith.constant 0 : i32
    %62 = vector.broadcast %c0_i32_42 : i32 to vector<4x1xi32>
    %63 = arith.cmpi ne, %61, %62 : vector<4x1xi32>
    %c0_i32_43 = arith.constant 0 : i32
    %64 = vector.broadcast %c0_i32_43 : i32 to vector<4x1xi32>
    %65 = arith.cmpi slt, %61, %64 : vector<4x1xi32>
    %c0_i32_44 = arith.constant 0 : i32
    %66 = arith.cmpi slt, %59, %c0_i32_44 : i32
    %67 = vector.broadcast %66 : i1 to vector<4x1xi1>
    %68 = vector.broadcast %67 : vector<4x1xi1> to vector<4x1xi1>
    %69 = arith.xori %65, %68 : vector<4x1xi1>
    %70 = arith.andi %69, %63 : vector<4x1xi1>
    %71 = vector.broadcast %59 : i32 to vector<4x1xi32>
    %72 = arith.addi %61, %71 : vector<4x1xi32>
    %73 = arith.select %70, %72, %61 : vector<4x1xi1>, vector<4x1xi32>
    %c1_i32_45 = arith.constant 1 : i32
    %74 = vector.broadcast %c1_i32_45 : i32 to vector<4x1xi32>
    %75 = arith.cmpi ne, %73, %74 : vector<4x1xi32>
    %76 = arith.extui %75 : vector<4x1xi1> to vector<4x1xi32>
    %77 = arith.sitofp %76 : vector<4x1xi32> to vector<4x1xf32>
    %c0_i32_46 = arith.constant 0 : i32
    %78 = vector.broadcast %c0_i32_46 : i32 to vector<4x1xi32>
    %79 = arith.cmpi ne, %73, %78 : vector<4x1xi32>
    %80 = arith.extui %79 : vector<4x1xi1> to vector<4x1xi32>
    %81 = arith.sitofp %80 : vector<4x1xi32> to vector<4x1xf32>
    %c0_47 = arith.constant 0 : index
    %c0_48 = arith.constant 0 : index
    %82 = vector.load %arg14[%c0_47, %c0_48] : memref<1x160xf32, #tpu.memory_space<vmem>>, vector<1x160xf32>
    %cst_49 = arith.constant 0.000000e+00 : f32
    %83 = vector.broadcast %cst_49 : f32 to vector<1x128xf32>
    %84 = vector.extract_strided_slice %56 {offsets = [1, 0], sizes = [3, 128], strides = [1, 1]} : vector<4x128xf32> to vector<3x128xf32>
    %85 = tpu.concatenate %84, %83 in 0 : vector<3x128xf32>, vector<1x128xf32> -> vector<4x128xf32>
    %86 = vector.broadcast %77 : vector<4x1xf32> to vector<4x128xf32>
    %87 = arith.mulf %85, %86 : vector<4x128xf32>
    %88 = vector.extract_strided_slice %56 {offsets = [0, 0], sizes = [3, 128], strides = [1, 1]} : vector<4x128xf32> to vector<3x128xf32>
    %89 = tpu.concatenate %83, %88 in 0 : vector<1x128xf32>, vector<3x128xf32> -> vector<4x128xf32>
    %90 = vector.broadcast %81 : vector<4x1xf32> to vector<4x128xf32>
    %91 = arith.mulf %89, %90 : vector<4x128xf32>
    %c0_50 = arith.constant 0 : index
    %c0_51 = arith.constant 0 : index
    %c0_52 = arith.constant 0 : index
    %92 = vector.load %arg13[%c0_50, %c0_51, %c0_52] : memref<3x128x160xf32, #tpu.memory_space<vmem>>, vector<1x128x160xf32>
    %93 = vector.shape_cast %92 : vector<1x128x160xf32> to vector<128x160xf32>
    %cst_53 = arith.constant dense<0.000000e+00> : vector<4x160xf32>
    %94 = tpu.matmul %91, %93, %cst_53 {dimension_numbers = #tpu.dot_dimension_numbers<[1], [0], [0], [1], [0, 0, 1, 1], [], []>} : vector<4x128xf32>, vector<128x160xf32>, vector<4x160xf32> -> vector<4x160xf32>
    %c1_54 = arith.constant 1 : index
    %c0_55 = arith.constant 0 : index
    %c0_56 = arith.constant 0 : index
    %95 = vector.load %arg13[%c1_54, %c0_55, %c0_56] : memref<3x128x160xf32, #tpu.memory_space<vmem>>, vector<1x128x160xf32>
    %96 = vector.shape_cast %95 : vector<1x128x160xf32> to vector<128x160xf32>
    %cst_57 = arith.constant dense<0.000000e+00> : vector<4x160xf32>
    %97 = tpu.matmul %56, %96, %cst_57 {dimension_numbers = #tpu.dot_dimension_numbers<[1], [0], [0], [1], [0, 0, 1, 1], [], []>} : vector<4x128xf32>, vector<128x160xf32>, vector<4x160xf32> -> vector<4x160xf32>
    %98 = arith.addf %94, %97 : vector<4x160xf32>
    %c2_58 = arith.constant 2 : index
    %c0_59 = arith.constant 0 : index
    %c0_60 = arith.constant 0 : index
    %99 = vector.load %arg13[%c2_58, %c0_59, %c0_60] : memref<3x128x160xf32, #tpu.memory_space<vmem>>, vector<1x128x160xf32>
    %100 = vector.shape_cast %99 : vector<1x128x160xf32> to vector<128x160xf32>
    %cst_61 = arith.constant dense<0.000000e+00> : vector<4x160xf32>
    %101 = tpu.matmul %87, %100, %cst_61 {dimension_numbers = #tpu.dot_dimension_numbers<[1], [0], [0], [1], [0, 0, 1, 1], [], []>} : vector<4x128xf32>, vector<128x160xf32>, vector<4x160xf32> -> vector<4x160xf32>
    %102 = arith.addf %98, %101 : vector<4x160xf32>
    %103 = vector.broadcast %82 : vector<1x160xf32> to vector<4x160xf32>
    %104 = arith.addf %102, %103 : vector<4x160xf32>
    %c0_62 = arith.constant 0 : index
    %c0_63 = arith.constant 0 : index
    %105 = vector.load %arg16[%c0_62, %c0_63] : memref<1x160xf32, #tpu.memory_space<vmem>>, vector<1x160xf32>
    %cst_64 = arith.constant 0.000000e+00 : f32
    %106 = vector.broadcast %cst_64 : f32 to vector<4x160xf32>
    %107 = arith.maximumf %104, %106 : vector<4x160xf32>
    %cst_65 = arith.constant 0.000000e+00 : f32
    %108 = vector.broadcast %cst_65 : f32 to vector<1x160xf32>
    %109 = vector.extract_strided_slice %107 {offsets = [1, 0], sizes = [3, 160], strides = [1, 1]} : vector<4x160xf32> to vector<3x160xf32>
    %110 = tpu.concatenate %109, %108 in 0 : vector<3x160xf32>, vector<1x160xf32> -> vector<4x160xf32>
    %111 = vector.broadcast %77 : vector<4x1xf32> to vector<4x160xf32>
    %112 = arith.mulf %110, %111 : vector<4x160xf32>
    %113 = vector.extract_strided_slice %107 {offsets = [0, 0], sizes = [3, 160], strides = [1, 1]} : vector<4x160xf32> to vector<3x160xf32>
    %114 = tpu.concatenate %108, %113 in 0 : vector<1x160xf32>, vector<3x160xf32> -> vector<4x160xf32>
    %115 = vector.broadcast %81 : vector<4x1xf32> to vector<4x160xf32>
    %116 = arith.mulf %114, %115 : vector<4x160xf32>
    %c0_66 = arith.constant 0 : index
    %c0_67 = arith.constant 0 : index
    %c0_68 = arith.constant 0 : index
    %117 = vector.load %arg15[%c0_66, %c0_67, %c0_68] : memref<3x160x160xf32, #tpu.memory_space<vmem>>, vector<1x160x160xf32>
    %118 = vector.shape_cast %117 : vector<1x160x160xf32> to vector<160x160xf32>
    %cst_69 = arith.constant dense<0.000000e+00> : vector<4x160xf32>
    %119 = tpu.matmul %116, %118, %cst_69 {dimension_numbers = #tpu.dot_dimension_numbers<[1], [0], [0], [1], [0, 0, 1, 1], [], []>} : vector<4x160xf32>, vector<160x160xf32>, vector<4x160xf32> -> vector<4x160xf32>
    %c1_70 = arith.constant 1 : index
    %c0_71 = arith.constant 0 : index
    %c0_72 = arith.constant 0 : index
    %120 = vector.load %arg15[%c1_70, %c0_71, %c0_72] : memref<3x160x160xf32, #tpu.memory_space<vmem>>, vector<1x160x160xf32>
    %121 = vector.shape_cast %120 : vector<1x160x160xf32> to vector<160x160xf32>
    %cst_73 = arith.constant dense<0.000000e+00> : vector<4x160xf32>
    %122 = tpu.matmul %107, %121, %cst_73 {dimension_numbers = #tpu.dot_dimension_numbers<[1], [0], [0], [1], [0, 0, 1, 1], [], []>} : vector<4x160xf32>, vector<160x160xf32>, vector<4x160xf32> -> vector<4x160xf32>
    %123 = arith.addf %119, %122 : vector<4x160xf32>
    %c2_74 = arith.constant 2 : index
    %c0_75 = arith.constant 0 : index
    %c0_76 = arith.constant 0 : index
    %124 = vector.load %arg15[%c2_74, %c0_75, %c0_76] : memref<3x160x160xf32, #tpu.memory_space<vmem>>, vector<1x160x160xf32>
    %125 = vector.shape_cast %124 : vector<1x160x160xf32> to vector<160x160xf32>
    %cst_77 = arith.constant dense<0.000000e+00> : vector<4x160xf32>
    %126 = tpu.matmul %112, %125, %cst_77 {dimension_numbers = #tpu.dot_dimension_numbers<[1], [0], [0], [1], [0, 0, 1, 1], [], []>} : vector<4x160xf32>, vector<160x160xf32>, vector<4x160xf32> -> vector<4x160xf32>
    %127 = arith.addf %123, %126 : vector<4x160xf32>
    %128 = vector.broadcast %105 : vector<1x160xf32> to vector<4x160xf32>
    %129 = arith.addf %127, %128 : vector<4x160xf32>
    %130 = arith.addf %129, %107 : vector<4x160xf32>
    %c0_78 = arith.constant 0 : index
    %c0_79 = arith.constant 0 : index
    %131 = vector.load %arg18[%c0_78, %c0_79] : memref<1x160xf32, #tpu.memory_space<vmem>>, vector<1x160xf32>
    %cst_80 = arith.constant 0.000000e+00 : f32
    %132 = vector.broadcast %cst_80 : f32 to vector<4x160xf32>
    %133 = arith.maximumf %130, %132 : vector<4x160xf32>
    %cst_81 = arith.constant 0.000000e+00 : f32
    %134 = vector.broadcast %cst_81 : f32 to vector<1x160xf32>
    %135 = vector.extract_strided_slice %133 {offsets = [1, 0], sizes = [3, 160], strides = [1, 1]} : vector<4x160xf32> to vector<3x160xf32>
    %136 = tpu.concatenate %135, %134 in 0 : vector<3x160xf32>, vector<1x160xf32> -> vector<4x160xf32>
    %137 = vector.broadcast %77 : vector<4x1xf32> to vector<4x160xf32>
    %138 = arith.mulf %136, %137 : vector<4x160xf32>
    %139 = vector.extract_strided_slice %133 {offsets = [0, 0], sizes = [3, 160], strides = [1, 1]} : vector<4x160xf32> to vector<3x160xf32>
    %140 = tpu.concatenate %134, %139 in 0 : vector<1x160xf32>, vector<3x160xf32> -> vector<4x160xf32>
    %141 = vector.broadcast %81 : vector<4x1xf32> to vector<4x160xf32>
    %142 = arith.mulf %140, %141 : vector<4x160xf32>
    %c0_82 = arith.constant 0 : index
    %c0_83 = arith.constant 0 : index
    %c0_84 = arith.constant 0 : index
    %143 = vector.load %arg17[%c0_82, %c0_83, %c0_84] : memref<3x160x160xf32, #tpu.memory_space<vmem>>, vector<1x160x160xf32>
    %144 = vector.shape_cast %143 : vector<1x160x160xf32> to vector<160x160xf32>
    %cst_85 = arith.constant dense<0.000000e+00> : vector<4x160xf32>
    %145 = tpu.matmul %142, %144, %cst_85 {dimension_numbers = #tpu.dot_dimension_numbers<[1], [0], [0], [1], [0, 0, 1, 1], [], []>} : vector<4x160xf32>, vector<160x160xf32>, vector<4x160xf32> -> vector<4x160xf32>
    %c1_86 = arith.constant 1 : index
    %c0_87 = arith.constant 0 : index
    %c0_88 = arith.constant 0 : index
    %146 = vector.load %arg17[%c1_86, %c0_87, %c0_88] : memref<3x160x160xf32, #tpu.memory_space<vmem>>, vector<1x160x160xf32>
    %147 = vector.shape_cast %146 : vector<1x160x160xf32> to vector<160x160xf32>
    %cst_89 = arith.constant dense<0.000000e+00> : vector<4x160xf32>
    %148 = tpu.matmul %133, %147, %cst_89 {dimension_numbers = #tpu.dot_dimension_numbers<[1], [0], [0], [1], [0, 0, 1, 1], [], []>} : vector<4x160xf32>, vector<160x160xf32>, vector<4x160xf32> -> vector<4x160xf32>
    %149 = arith.addf %145, %148 : vector<4x160xf32>
    %c2_90 = arith.constant 2 : index
    %c0_91 = arith.constant 0 : index
    %c0_92 = arith.constant 0 : index
    %150 = vector.load %arg17[%c2_90, %c0_91, %c0_92] : memref<3x160x160xf32, #tpu.memory_space<vmem>>, vector<1x160x160xf32>
    %151 = vector.shape_cast %150 : vector<1x160x160xf32> to vector<160x160xf32>
    %cst_93 = arith.constant dense<0.000000e+00> : vector<4x160xf32>
    %152 = tpu.matmul %138, %151, %cst_93 {dimension_numbers = #tpu.dot_dimension_numbers<[1], [0], [0], [1], [0, 0, 1, 1], [], []>} : vector<4x160xf32>, vector<160x160xf32>, vector<4x160xf32> -> vector<4x160xf32>
    %153 = arith.addf %149, %152 : vector<4x160xf32>
    %154 = vector.broadcast %131 : vector<1x160xf32> to vector<4x160xf32>
    %155 = arith.addf %153, %154 : vector<4x160xf32>
    %156 = arith.addf %155, %133 : vector<4x160xf32>
    %c0_94 = arith.constant 0 : index
    %c0_95 = arith.constant 0 : index
    %c0_96 = arith.constant 0 : index
    %157 = vector.load %arg19[%c0_94, %c0_95, %c0_96] : memref<1x4x160xf32, #tpu.memory_space<vmem>>, vector<1x4x160xf32>
    %158 = vector.shape_cast %157 : vector<1x4x160xf32> to vector<4x160xf32>
    %159 = vector.shape_cast %156 : vector<4x160xf32> to vector<1x4x160xf32>
    tpu.vector_store %arg19[%c0_94, %c0_95, %c0_96], %159 {strides = array<i32>} : memref<1x4x160xf32, #tpu.memory_space<vmem>>, vector<1x4x160xf32>,
    return
  }
  func.func @transform_0(%arg0: i32) -> (i32, i32, i32) {
    %c0_i32 = arith.constant 0 : i32
    %c0_i32_0 = arith.constant 0 : i32
    %c0_i32_1 = arith.constant 0 : i32
    return %arg0, %c0_i32, %c0_i32_0 : i32, i32, i32
  }
  func.func @transform_1(%arg0: i32) -> (i32, i32) {
    %c0_i32 = arith.constant 0 : i32
    %c0_i32_0 = arith.constant 0 : i32
    %c0_i32_1 = arith.constant 0 : i32
    return %c0_i32, %c0_i32_0 : i32, i32
  }
  func.func @transform_2(%arg0: i32) -> (i32, i32) {
    %c0_i32 = arith.constant 0 : i32
    %c0_i32_0 = arith.constant 0 : i32
    %c0_i32_1 = arith.constant 0 : i32
    return %c0_i32, %c0_i32_0 : i32, i32
  }
  func.func @transform_3(%arg0: i32) -> (i32, i32) {
    %c0_i32 = arith.constant 0 : i32
    %c0_i32_0 = arith.constant 0 : i32
    %c0_i32_1 = arith.constant 0 : i32
    return %c0_i32, %c0_i32_0 : i32, i32
  }
  func.func @transform_4(%arg0: i32) -> (i32, i32) {
    %c0_i32 = arith.constant 0 : i32
    %c0_i32_0 = arith.constant 0 : i32
    %c0_i32_1 = arith.constant 0 : i32
    return %c0_i32, %c0_i32_0 : i32, i32
  }
  func.func @transform_5(%arg0: i32) -> (i32, i32) {
    %c0_i32 = arith.constant 0 : i32
    %c0_i32_0 = arith.constant 0 : i32
    %c0_i32_1 = arith.constant 0 : i32
    return %c0_i32, %c0_i32_0 : i32, i32
  }
  func.func @transform_6(%arg0: i32) -> (i32, i32) {
    %c0_i32 = arith.constant 0 : i32
    %c0_i32_0 = arith.constant 0 : i32
    %c0_i32_1 = arith.constant 0 : i32
    return %c0_i32, %c0_i32_0 : i32, i32
  }
  func.func @transform_7(%arg0: i32) -> (i32, i32) {
    %c0_i32 = arith.constant 0 : i32
    %c0_i32_0 = arith.constant 0 : i32
    %c0_i32_1 = arith.constant 0 : i32
    return %c0_i32, %c0_i32_0 : i32, i32
  }
  func.func @transform_8(%arg0: i32) -> (i32, i32) {
    %c0_i32 = arith.constant 0 : i32
    %c0_i32_0 = arith.constant 0 : i32
    %c0_i32_1 = arith.constant 0 : i32
    return %c0_i32, %c0_i32_0 : i32, i32
  }
  func.func @transform_9(%arg0: i32) -> (i32, i32) {
    %c0_i32 = arith.constant 0 : i32
    %c0_i32_0 = arith.constant 0 : i32
    %c0_i32_1 = arith.constant 0 : i32
    return %c0_i32, %c0_i32_0 : i32, i32
  }
  func.func @transform_10(%arg0: i32) -> (i32, i32, i32) {
    %c0_i32 = arith.constant 0 : i32
    %c0_i32_0 = arith.constant 0 : i32
    %c0_i32_1 = arith.constant 0 : i32
    %c0_i32_2 = arith.constant 0 : i32
    return %c0_i32, %c0_i32_0, %c0_i32_1 : i32, i32, i32
  }
  func.func @transform_11(%arg0: i32) -> (i32, i32) {
    %c0_i32 = arith.constant 0 : i32
    %c0_i32_0 = arith.constant 0 : i32
    %c0_i32_1 = arith.constant 0 : i32
    return %c0_i32, %c0_i32_0 : i32, i32
  }
  func.func @transform_12(%arg0: i32) -> (i32, i32, i32) {
    %c0_i32 = arith.constant 0 : i32
    %c0_i32_0 = arith.constant 0 : i32
    %c0_i32_1 = arith.constant 0 : i32
    %c0_i32_2 = arith.constant 0 : i32
    return %c0_i32, %c0_i32_0, %c0_i32_1 : i32, i32, i32
  }
  func.func @transform_13(%arg0: i32) -> (i32, i32) {
    %c0_i32 = arith.constant 0 : i32
    %c0_i32_0 = arith.constant 0 : i32
    %c0_i32_1 = arith.constant 0 : i32
    return %c0_i32, %c0_i32_0 : i32, i32
  }
  func.func @transform_14(%arg0: i32) -> (i32, i32, i32) {
    %c0_i32 = arith.constant 0 : i32
    %c0_i32_0 = arith.constant 0 : i32
    %c0_i32_1 = arith.constant 0 : i32
    %c0_i32_2 = arith.constant 0 : i32
    return %c0_i32, %c0_i32_0, %c0_i32_1 : i32, i32, i32
  }
  func.func @transform_15(%arg0: i32) -> (i32, i32) {
    %c0_i32 = arith.constant 0 : i32
    %c0_i32_0 = arith.constant 0 : i32
    %c0_i32_1 = arith.constant 0 : i32
    return %c0_i32, %c0_i32_0 : i32, i32
  }
  func.func @transform_16(%arg0: i32) -> (i32, i32, i32) {
    %c0_i32 = arith.constant 0 : i32
    %c0_i32_0 = arith.constant 0 : i32
    %c0_i32_1 = arith.constant 0 : i32
    %c0_i32_2 = arith.constant 0 : i32
    return %c0_i32, %c0_i32_0, %c0_i32_1 : i32, i32, i32
  }
  func.func @transform_17(%arg0: i32) -> (i32, i32) {
    %c0_i32 = arith.constant 0 : i32
    %c0_i32_0 = arith.constant 0 : i32
    %c0_i32_1 = arith.constant 0 : i32
    return %c0_i32, %c0_i32_0 : i32, i32
  }
  func.func @transform_18(%arg0: i32) -> (i32, i32, i32) {
    %c0_i32 = arith.constant 0 : i32
    %c0_i32_0 = arith.constant 0 : i32
    %c0_i32_1 = arith.constant 0 : i32
    return %arg0, %c0_i32, %c0_i32_0 : i32, i32, i32
  }
}

</mosaic_0001>

<llo_original>
// kernel: mul.147
$region0: #{mul.147}
  #allocation0 [shape = 's32[1]{0}', space=sflag, size = 0x4, scoped, tag = 'scoped memory for mul.147']
  %s0 = inlined_call_operand.vmem [shape: f32[16], index: 0, kind: input, shape index: {}]
  %s1 = inlined_call_operand.vmem [shape: f32[16], index: 1, kind: input, shape index: {}]
  %s2 = inlined_call_operand.vmem [shape: f32[16], index: 2, kind: output, shape index: {}]
  %v3 = vld [vmem:[%s0] sm:$0x1]
  %v4 = vld [vmem:[%s1] sm:$0x1]
  %5 = xla_tuple %v3, %v4
  %6 = xla_tuple %5
  %v7 = vmul.f32 %v3, %v4
  %8 = xla_tuple %v7
  %9 = vst [vmem:[%s2] sm:$0x1] %v7

// kernel: tile.33
$region0: #{tile.33}
  #allocation0 [shape = 's32[1]{0}', space=sflag, size = 0x4, scoped, tag = 'scoped memory for tile.33']
  %s0 = inlined_call_operand.vmem [shape: f32[16], index: 0, kind: input, shape index: {}]
  %s1 = inlined_call_operand.vmem [shape: f32[2,16], index: 1, kind: output, shape index: {}]
  // Predicated region
  $region2: #{tile.33} parent=0 // pred_check
    _
  $region3: #{tile.33} parent=0 // pred_check_branch
    %3 = sbr.rel (0) target = $region5
  $region4: #{tile.33} parent=0 // pred_region
    _
  $region5: #{tile.33} parent=0 // pred_fallthru
    _
  %v4 = vld [vmem:[%s0] ss:$0 sm:$0xff]
  %5 = vst [vmem:[%s1] sm:$0x3] %v4

// kernel: tile.0
$region0: #{tile.0}
  %s0 = inlined_call_operand.vmem [shape: f32[2,16], index: 0, kind: input, shape index: {}]
  %s1 = inlined_call_operand.vmem [shape: f32[32,1], index: 1, kind: output, shape index: {}]
  $region1: #{tile.0} parent=0
    #allocation0 [shape = 'u8[4096]{0}', space=vmem, size = 0x1000, scoped, tag = 'scoped mem for input reshape']
    %s3 = ssub.s32 4, 1
    %v4 = vld [vmem:[%s0] sm:%s3]
    %5 = vst [vmem:[#allocation0] sm:%s3] %v4
    %v6 = vld [vmem:[#allocation0] sm:$0x3]
    %vm7 = vcmask 7168
    %8 = vst.msk [vmem:[%s1] ss:$16 sm:$0x3] %vm7, %v6
    %v9 = vld [vmem:[#allocation0] sm:$0x3]
    %10 = vrot.lane.b32.xlu0 %v9, 127
    %v11 = vpop.permute.xlu0 %10
    %vm12 = vcmask 7168
    %s13 = scalar_lea.vmem %s1, 1
    %14 = vst.msk [vmem:[%s13] ss:$16 sm:$0x3] %vm12, %v11
    %v15 = vld [vmem:[#allocation0] sm:$0x3]
    %16 = vrot.lane.b32.xlu0 %v15, 126
    %v17 = vpop.permute.xlu0 %16
    %vm18 = vcmask 7168
    %s19 = scalar_lea.vmem %s1, 2
    %20 = vst.msk [vmem:[%s19] ss:$16 sm:$0x3] %vm18, %v17
    %v21 = vld [vmem:[#allocation0] sm:$0x3]
    %22 = vrot.lane.b32.xlu0 %v21, 125
    %v23 = vpop.permute.xlu0 %22
    %vm24 = vcmask 7168
    %s25 = scalar_lea.vmem %s1, 3
    %26 = vst.msk [vmem:[%s25] ss:$16 sm:$0x3] %vm24, %v23
    %v27 = vld [vmem:[#allocation0] sm:$0x3]
    %28 = vrot.lane.b32.xlu0 %v27, 124
    %v29 = vpop.permute.xlu0 %28
    %vm30 = vcmask 7168
    %s31 = scalar_lea.vmem %s1, 4
    %32 = vst.msk [vmem:[%s31] ss:$16 sm:$0x3] %vm30, %v29
    %v33 = vld [vmem:[#allocation0] sm:$0x3]
    %34 = vrot.lane.b32.xlu0 %v33, 123
    %v35 = vpop.permute.xlu0 %34
    %vm36 = vcmask 7168
    %s37 = scalar_lea.vmem %s1, 5
    %38 = vst.msk [vmem:[%s37] ss:$16 sm:$0x3] %vm36, %v35
    %v39 = vld [vmem:[#allocation0] sm:$0x3]
    %40 = vrot.lane.b32.xlu0 %v39, 122
    %v41 = vpop.permute.xlu0 %40
    %vm42 = vcmask 7168
    %s43 = scalar_lea.vmem %s1, 6
    %44 = vst.msk [vmem:[%s43] ss:$16 sm:$0x3] %vm42, %v41
    %v45 = vld [vmem:[#allocation0] sm:$0x3]
    %46 = vrot.lane.b32.xlu0 %v45, 121
    %v47 = vpop.permute.xlu0 %46
    %vm48 = vcmask 7168
    %s49 = scalar_lea.vmem %s1, 7
    %50 = vst.msk [vmem:[%s49] ss:$16 sm:$0x3] %vm48, %v47
    %v51 = vld [vmem:[#allocation0] sm:$0x3]
    %52 = vrot.lane.b32.xlu0 %v51, 120
    %v53 = vpop.permute.xlu0 %52
    %vm54 = vcmask 7168
    %s55 = scalar_lea.vmem %s1, 8
    %56 = vst.msk [vmem:[%s55] ss:$16 sm:$0x3] %vm54, %v53
    %v57 = vld [vmem:[#allocation0] sm:$0x3]
    %58 = vrot.lane.b32.xlu0 %v57, 119
    %v59 = vpop.permute.xlu0 %58
    %vm60 = vcmask 7168
    %s61 = scalar_lea.vmem %s1, 9
    %62 = vst.msk [vmem:[%s61] ss:$16 sm:$0x3] %vm60, %v59
    %v63 = vld [vmem:[#allocation0] sm:$0x3]
    %64 = vrot.lane.b32.xlu0 %v63, 118
    %v65 = vpop.permute.xlu0 %64
    %vm66 = vcmask 7168
    %s67 = scalar_lea.vmem %s1, 10
    %68 = vst.msk [vmem:[%s67] ss:$16 sm:$0x3] %vm66, %v65
    %v69 = vld [vmem:[#allocation0] sm:$0x3]
    %70 = vrot.lane.b32.xlu0 %v69, 117
    %v71 = vpop.permute.xlu0 %70
    %vm72 = vcmask 7168
    %s73 = scalar_lea.vmem %s1, 11
    %74 = vst.msk [vmem:[%s73] ss:$16 sm:$0x3] %vm72, %v71
    %v75 = vld [vmem:[#allocation0] sm:$0x3]
    %76 = vrot.lane.b32.xlu0 %v75, 116
    %v77 = vpop.permute.xlu0 %76
    %vm78 = vcmask 7168
    %s79 = scalar_lea.vmem %s1, 12
    %80 = vst.msk [vmem:[%s79] ss:$16 sm:$0x3] %vm78, %v77
    %v81 = vld [vmem:[#allocation0] sm:$0x3]
    %82 = vrot.lane.b32.xlu0 %v81, 115
    %v83 = vpop.permute.xlu0 %82
    %vm84 = vcmask 7168
    %s85 = scalar_lea.vmem %s1, 13
    %86 = vst.msk [vmem:[%s85] ss:$16 sm:$0x3] %vm84, %v83
    %v87 = vld [vmem:[#allocation0] sm:$0x3]
    %88 = vrot.lane.b32.xlu0 %v87, 114
    %v89 = vpop.permute.xlu0 %88
    %vm90 = vcmask 7168
    %s91 = scalar_lea.vmem %s1, 14
    %92 = vst.msk [vmem:[%s91] ss:$16 sm:$0x3] %vm90, %v89
    %v93 = vld [vmem:[#allocation0] sm:$0x3]
    %94 = vrot.lane.b32.xlu0 %v93, 113
    %v95 = vpop.permute.xlu0 %94
    %vm96 = vcmask 7168
    %s97 = scalar_lea.vmem %s1, 15
    %98 = vst.msk [vmem:[%s97] ss:$16 sm:$0x3] %vm96, %v95

// kernel: tile.58
$region0: #{tile.58}
  #allocation0 [shape = 's32[1]{0}', space=sflag, size = 0x4, scoped, tag = 'scoped memory for tile.58']
  %s0 = inlined_call_operand.vmem [shape: f32[2], index: 0, kind: input, shape index: {}]
  %s1 = inlined_call_operand.vmem [shape: f32[2,2], index: 1, kind: output, shape index: {}]
  // Predicated region
  $region2: #{tile.58} parent=0 // pred_check
    _
  $region3: #{tile.58} parent=0 // pred_check_branch
    %3 = sbr.rel (0) target = $region5
  $region4: #{tile.58} parent=0 // pred_region
    _
  $region5: #{tile.58} parent=0 // pred_fallthru
    _
  %v4 = vld [vmem:[%s0] ss:$0 sm:$0xff]
  %5 = vst [vmem:[%s1] sm:$0x3] %v4

// kernel: tile.5
$region0: #{tile.5}
  %s0 = inlined_call_operand.vmem [shape: f32[2,2], index: 0, kind: input, shape index: {}]
  %s1 = inlined_call_operand.vmem [shape: f32[4,1], index: 1, kind: output, shape index: {}]
  $region1: #{tile.5} parent=0
    #allocation0 [shape = 'u8[4096]{0}', space=vmem, size = 0x1000, scoped, tag = 'scoped mem for output reshape']
    #allocation1 [shape = 'u8[4096]{0}', space=vmem, size = 0x1000, scoped, tag = 'scoped mem for input reshape']
    %s3 = ssub.s32 4, 1
    %v4 = vld [vmem:[%s0] sm:%s3]
    %5 = vst [vmem:[#allocation1] sm:%s3] %v4
    %v6 = vld [vmem:[#allocation1] sm:$0x3]
    %vm7 = vcmask 7168
    %8 = vst.msk [vmem:[#allocation0] ss:$2 sm:$0x3] %vm7, %v6
    %v9 = vld [vmem:[#allocation1] sm:$0x3]
    %10 = vrot.lane.b32.xlu0 %v9, 127
    %v11 = vpop.permute.xlu0 %10
    %vm12 = vcmask 7168
    %s13 = scalar_lea.vmem [#allocation0], 1
    %14 = vst.msk [vmem:[%s13] ss:$2 sm:$0x3] %vm12, %v11
    %s16 = ssub.s32 16, 1
    %v17 = vld [vmem:[#allocation0] sm:%s16]
    %s19 = ssub.s32 16, 1
    %20 = vst [vmem:[%s1] sm:%s19] %v17

// kernel: social_stgcnn_forward.1
$region0: #{social_stgcnn_forward.1}
  #allocation0 [shape = 'u32[]', space=smem, size = 0x4, offset = 0x4, fixed_abs, tag = 'smem constant byte address 0x4 - core index']
  #allocation1 [shape = 'u32[72,128]{1,0:T(1,128)}', space=vmem, size = 0x9000, scoped, tag = 'internal scratch']
  %s0 = inlined_call_operand.vmem [shape: f32[1,4,128], index: 0, kind: input, shape index: {}]
  %s1 = inlined_call_operand.vmem [shape: f32[128,128], index: 1, kind: input, shape index: {}]
  %s2 = inlined_call_operand.vmem [shape: f32[32,4], index: 2, kind: input, shape index: {}]
  %s3 = inlined_call_operand.vmem [shape: f32[32,1], index: 3, kind: input, shape index: {}]
  %s4 = inlined_call_operand.vmem [shape: f32[32,1], index: 4, kind: input, shape index: {}]
  %s5 = inlined_call_operand.vmem [shape: f32[32,4], index: 5, kind: input, shape index: {}]
  %s6 = inlined_call_operand.vmem [shape: f32[32,1], index: 6, kind: input, shape index: {}]
  %s7 = inlined_call_operand.vmem [shape: f32[32,32], index: 7, kind: input, shape index: {}]
  %s8 = inlined_call_operand.vmem [shape: f32[32,1], index: 8, kind: input, shape index: {}]
  %s9 = inlined_call_operand.vmem [shape: f32[32,1], index: 9, kind: input, shape index: {}]
  %s10 = inlined_call_operand.vmem [shape: f32[3,4,32], index: 10, kind: input, shape index: {}]
  %s11 = inlined_call_operand.vmem [shape: f32[4,1], index: 11, kind: input, shape index: {}]
  %s12 = inlined_call_operand.vmem [shape: f32[3,128,160], index: 12, kind: input, shape index: {}]
  %s13 = inlined_call_operand.vmem [shape: f32[1,160], index: 13, kind: input, shape index: {}]
  %s14 = inlined_call_operand.vmem [shape: f32[3,160,160], index: 14, kind: input, shape index: {}]
  %s15 = inlined_call_operand.vmem [shape: f32[1,160], index: 15, kind: input, shape index: {}]
  %s16 = inlined_call_operand.vmem [shape: f32[3,160,160], index: 16, kind: input, shape index: {}]
  %s17 = inlined_call_operand.vmem [shape: f32[1,160], index: 17, kind: input, shape index: {}]
  %s18 = inlined_call_operand.vmem [shape: f32[1,4,160], index: 18, kind: output, shape index: {}]
  %s19 = sld [smem:[#allocation0]]
  $region82: #{social_stgcnn_forward.1} parent=0
    _
  %s21 = ssub.s32 1, %s19
  %s22 = scalar_select 0, %s21, %s19
  // Predicated region
  $region2: #{social_stgcnn_forward.1} parent=0 // pred_check
    _
  $region3: #{social_stgcnn_forward.1} parent=0 // pred_check_branch
    %24 = sbr.rel (0) target = $region5
  $region4: #{social_stgcnn_forward.1} parent=0 // pred_region
    _
  $region5: #{social_stgcnn_forward.1} parent=0 // pred_fallthru
    _
  // Predicated region
  $region6: #{social_stgcnn_forward.1} parent=0 // pred_check
    _
  $region7: #{social_stgcnn_forward.1} parent=0 // pred_check_branch
    %26 = sbr.rel (0) target = $region9
  $region8: #{social_stgcnn_forward.1} parent=0 // pred_region
    _
  $region9: #{social_stgcnn_forward.1} parent=0 // pred_fallthru
    _
  // Predicated region
  $region10: #{social_stgcnn_forward.1} parent=0 // pred_check
    _
  $region11: #{social_stgcnn_forward.1} parent=0 // pred_check_branch
    %28 = sbr.rel (0) target = $region13
  $region12: #{social_stgcnn_forward.1} parent=0 // pred_region
    _
  $region13: #{social_stgcnn_forward.1} parent=0 // pred_fallthru
    _
  // Predicated region
  $region14: #{social_stgcnn_forward.1} parent=0 // pred_check
    _
  $region15: #{social_stgcnn_forward.1} parent=0 // pred_check_branch
    %30 = sbr.rel (0) target = $region17
  $region16: #{social_stgcnn_forward.1} parent=0 // pred_region
    _
  $region17: #{social_stgcnn_forward.1} parent=0 // pred_fallthru
    _
  // Predicated region
  $region18: #{social_stgcnn_forward.1} parent=0 // pred_check
    _
  $region19: #{social_stgcnn_forward.1} parent=0 // pred_check_branch
    %32 = sbr.rel (0) target = $region21
  $region20: #{social_stgcnn_forward.1} parent=0 // pred_region
    _
  $region21: #{social_stgcnn_forward.1} parent=0 // pred_fallthru
    _
  // Predicated region
  $region22: #{social_stgcnn_forward.1} parent=0 // pred_check
    _
  $region23: #{social_stgcnn_forward.1} parent=0 // pred_check_branch
    %34 = sbr.rel (0) target = $region25
  $region24: #{social_stgcnn_forward.1} parent=0 // pred_region
    _
  $region25: #{social_stgcnn_forward.1} parent=0 // pred_fallthru
    _
  // Predicated region
  $region26: #{social_stgcnn_forward.1} parent=0 // pred_check
    _
  $region27: #{social_stgcnn_forward.1} parent=0 // pred_check_branch
    %36 = sbr.rel (0) target = $region29
  $region28: #{social_stgcnn_forward.1} parent=0 // pred_region
    _
  $region29: #{social_stgcnn_forward.1} parent=0 // pred_fallthru
    _
  // Predicated region
  $region30: #{social_stgcnn_forward.1} parent=0 // pred_check
    _
  $region31: #{social_stgcnn_forward.1} parent=0 // pred_check_branch
    %38 = sbr.rel (0) target = $region33
  $region32: #{social_stgcnn_forward.1} parent=0 // pred_region
    _
  $region33: #{social_stgcnn_forward.1} parent=0 // pred_fallthru
    _
  // Predicated region
  $region34: #{social_stgcnn_forward.1} parent=0 // pred_check
    _
  $region35: #{social_stgcnn_forward.1} parent=0 // pred_check_branch
    %40 = sbr.rel (0) target = $region37
  $region36: #{social_stgcnn_forward.1} parent=0 // pred_region
    _
  $region37: #{social_stgcnn_forward.1} parent=0 // pred_fallthru
    _
  // Predicated region
  $region38: #{social_stgcnn_forward.1} parent=0 // pred_check
    _
  $region39: #{social_stgcnn_forward.1} parent=0 // pred_check_branch
    %42 = sbr.rel (0) target = $region41
  $region40: #{social_stgcnn_forward.1} parent=0 // pred_region
    _
  $region41: #{social_stgcnn_forward.1} parent=0 // pred_fallthru
    _
  // Predicated region
  $region42: #{social_stgcnn_forward.1} parent=0 // pred_check
    _
  $region43: #{social_stgcnn_forward.1} parent=0 // pred_check_branch
    %44 = sbr.rel (0) target = $region45
  $region44: #{social_stgcnn_forward.1} parent=0 // pred_region
    _
  $region45: #{social_stgcnn_forward.1} parent=0 // pred_fallthru
    _
  // Predicated region
  $region46: #{social_stgcnn_forward.1} parent=0 // pred_check
    _
  $region47: #{social_stgcnn_forward.1} parent=0 // pred_check_branch
    %46 = sbr.rel (0) target = $region49
  $region48: #{social_stgcnn_forward.1} parent=0 // pred_region
    _
  $region49: #{social_stgcnn_forward.1} parent=0 // pred_fallthru
    _
  // Predicated region
  $region50: #{social_stgcnn_forward.1} parent=0 // pred_check
    _
  $region51: #{social_stgcnn_forward.1} parent=0 // pred_check_branch
    %48 = sbr.rel (0) target = $region53
  $region52: #{social_stgcnn_forward.1} parent=0 // pred_region
    _
  $region53: #{social_stgcnn_forward.1} parent=0 // pred_fallthru
    _
  // Predicated region
  $region54: #{social_stgcnn_forward.1} parent=0 // pred_check
    _
  $region55: #{social_stgcnn_forward.1} parent=0 // pred_check_branch
    %50 = sbr.rel (0) target = $region57
  $region56: #{social_stgcnn_forward.1} parent=0 // pred_region
    _
  $region57: #{social_stgcnn_forward.1} parent=0 // pred_fallthru
    _
  // Predicated region
  $region58: #{social_stgcnn_forward.1} parent=0 // pred_check
    _
  $region59: #{social_stgcnn_forward.1} parent=0 // pred_check_branch
    %52 = sbr.rel (0) target = $region61
  $region60: #{social_stgcnn_forward.1} parent=0 // pred_region
    _
  $region61: #{social_stgcnn_forward.1} parent=0 // pred_fallthru
    _
  // Predicated region
  $region62: #{social_stgcnn_forward.1} parent=0 // pred_check
    _
  $region63: #{social_stgcnn_forward.1} parent=0 // pred_check_branch
    %54 = sbr.rel (0) target = $region65
  $region64: #{social_stgcnn_forward.1} parent=0 // pred_region
    _
  $region65: #{social_stgcnn_forward.1} parent=0 // pred_fallthru
    _
  // Predicated region
  $region66: #{social_stgcnn_forward.1} parent=0 // pred_check
    _
  $region67: #{social_stgcnn_forward.1} parent=0 // pred_check_branch
    %56 = sbr.rel (0) target = $region69
  $region68: #{social_stgcnn_forward.1} parent=0 // pred_region
    _
  $region69: #{social_stgcnn_forward.1} parent=0 // pred_fallthru
    _
  // Predicated region
  $region70: #{social_stgcnn_forward.1} parent=0 // pred_check
    _
  $region71: #{social_stgcnn_forward.1} parent=0 // pred_check_branch
    %58 = sbr.rel (0) target = $region73
  $region72: #{social_stgcnn_forward.1} parent=0 // pred_region
    _
  $region73: #{social_stgcnn_forward.1} parent=0 // pred_fallthru
    _
  %v59 = vld [vmem:[%s1] sm:$0xff]
  %v60 = vld [vmem:[%s1 + $0x8] sm:$0xff]
  %v61 = vld [vmem:[%s1 + $0x10] sm:$0xff]
  %v62 = vld [vmem:[%s1 + $0x18] sm:$0xff]
  %v63 = vld [vmem:[%s1 + $0x20] sm:$0xff]
  %v64 = vld [vmem:[%s1 + $0x28] sm:$0xff]
  %v65 = vld [vmem:[%s1 + $0x30] sm:$0xff]
  %v66 = vld [vmem:[%s1 + $0x38] sm:$0xff]
  %v67 = vld [vmem:[%s1 + $0x40] sm:$0xff]
  %v68 = vld [vmem:[%s1 + $0x48] sm:$0xff]
  %v69 = vld [vmem:[%s1 + $0x50] sm:$0xff]
  %v70 = vld [vmem:[%s1 + $0x58] sm:$0xff]
  %v71 = vld [vmem:[%s1 + $0x60] sm:$0xff]
  %v72 = vld [vmem:[%s1 + $0x68] sm:$0xff]
  %v73 = vld [vmem:[%s1 + $0x70] sm:$0xff]
  %v74 = vld [vmem:[%s1 + $0x78] sm:$0xff]
  %v75 = vld [vmem:[%s0] sm:$0xf]
  %v76 = vld [vmem:[%s2] sm:$0xff]
  %v77 = vld [vmem:[%s2 + $0x8] sm:$0xff]
  %v78 = vld [vmem:[%s2 + $0x10] sm:$0xff]
  %v79 = vld [vmem:[%s2 + $0x18] sm:$0xff]
  %v80 = vld [vmem:[%s3] sm:$0xff]
  %v81 = vld [vmem:[%s3 + $0x8] sm:$0xff]
  %v82 = vld [vmem:[%s3 + $0x10] sm:$0xff]
  %v83 = vld [vmem:[%s3 + $0x18] sm:$0xff]
  %v84 = vld [vmem:[%s4] sm:$0xff]
  %v85 = vld [vmem:[%s4 + $0x8] sm:$0xff]
  %v86 = vld [vmem:[%s4 + $0x10] sm:$0xff]
  %v87 = vld [vmem:[%s4 + $0x18] sm:$0xff]
  %v88 = vld [vmem:[%s5] sm:$0xff]
  %v89 = vld [vmem:[%s5 + $0x8] sm:$0xff]
  %v90 = vld [vmem:[%s5 + $0x10] sm:$0xff]
  %v91 = vld [vmem:[%s5 + $0x18] sm:$0xff]
  %v92 = vld [vmem:[%s6] sm:$0xff]
  %v93 = vld [vmem:[%s6 + $0x8] sm:$0xff]
  %v94 = vld [vmem:[%s6 + $0x10] sm:$0xff]
  %v95 = vld [vmem:[%s6 + $0x18] sm:$0xff]
  %97 = vset.pattern.permute.xlu0 0
  %98 = vperm.xlu0 %97, %v92
  %v99 = vpop.permute.xlu0 %98
  %102 = vset.pattern.permute.xlu0 0
  %103 = vperm.xlu0 %102, %v93
  %v104 = vpop.permute.xlu0 %103
  %107 = vset.pattern.permute.xlu0 0
  %108 = vperm.xlu0 %107, %v94
  %v109 = vpop.permute.xlu0 %108
  %112 = vset.pattern.permute.xlu0 0
  %113 = vperm.xlu0 %112, %v95
  %v114 = vpop.permute.xlu0 %113
  %vm116 = vcmask 31744
  %v118 = vsel %vm116, %v88, 0
  %v121 = vsel %vm116, %v89, 0
  %v124 = vsel %vm116, %v90, 0
  %v127 = vsel %vm116, %v91, 0
  %vm129 = vcmask 1043456
  %v131 = vsel %vm129, %v75, 0
  %133 = vmatpush.msra.mxu0 0.0
  %134 = vmatpush.msra.mxu0 0.0
  %135 = vmatpush.msra.mxu0 0.0
  %136 = vmatpush.msra.mxu0 0.0
  %137 = vmatpush.msra.mxu0 0.0
  %138 = vmatpush.msra.mxu0 0.0
  %139 = vmatpush.msra.mxu0 0.0
  %140 = vmatpush.msra.mxu0 0.0
  %141 = vmatpush.msra.mxu0 0.0
  %142 = vmatpush.msra.mxu0 0.0
  %143 = vmatpush.msra.mxu0 0.0
  %144 = vmatpush.msra.mxu0 0.0
  %145 = vmatpush.msra.mxu0 0.0
  %146 = vmatpush.msra.mxu0 0.0
  %147 = vmatpush.msra.mxu0 0.0
  %148 = vmatpush.msra.mxu0 %v131
  %149 = vmatmul.f32.gmra.mxu0 %v118
  %v150 = vpop.f32.mrf.mxu0
  %v151 = vadd.f32 %v99, %v150
  %152 = vmatmul.f32.gmra.mxu0 %v121
  %v153 = vpop.f32.mrf.mxu0
  %v154 = vadd.f32 %v104, %v153
  %155 = vmatmul.f32.gmra.mxu0 %v124
  %v156 = vpop.f32.mrf.mxu0
  %v157 = vadd.f32 %v109, %v156
  %158 = vmatmul.f32.gmra.mxu0 %v127
  %v159 = vpop.f32.mrf.mxu0
  %v160 = vadd.f32 %v114, %v159
  %161 = vdwg.mxu0
  %163 = vset.pattern.permute.xlu0 0
  %164 = vperm.xlu0 %163, %v80
  %v165 = vpop.permute.xlu0 %164
  %168 = vset.pattern.permute.xlu0 0
  %169 = vperm.xlu0 %168, %v81
  %v170 = vpop.permute.xlu0 %169
  %173 = vset.pattern.permute.xlu0 0
  %174 = vperm.xlu0 %173, %v82
  %v175 = vpop.permute.xlu0 %174
  %178 = vset.pattern.permute.xlu0 0
  %179 = vperm.xlu0 %178, %v83
  %v180 = vpop.permute.xlu0 %179
  %v183 = vsel %vm116, %v76, 0
  %v186 = vsel %vm116, %v77, 0
  %v189 = vsel %vm116, %v78, 0
  %v192 = vsel %vm116, %v79, 0
  %194 = vmatpush.msra.mxu0 0.0
  %195 = vmatpush.msra.mxu0 0.0
  %196 = vmatpush.msra.mxu0 0.0
  %197 = vmatpush.msra.mxu0 0.0
  %198 = vmatpush.msra.mxu0 0.0
  %199 = vmatpush.msra.mxu0 0.0
  %200 = vmatpush.msra.mxu0 0.0
  %201 = vmatpush.msra.mxu0 0.0
  %202 = vmatpush.msra.mxu0 0.0
  %203 = vmatpush.msra.mxu0 0.0
  %204 = vmatpush.msra.mxu0 0.0
  %205 = vmatpush.msra.mxu0 0.0
  %206 = vmatpush.msra.mxu0 0.0
  %207 = vmatpush.msra.mxu0 0.0
  %208 = vmatpush.msra.mxu0 0.0
  %209 = vmatpush.msra.mxu0 %v131
  %210 = vmatmul.f32.gmra.mxu0 %v183
  %v211 = vpop.f32.mrf.mxu0
  %v212 = vadd.f32 %v165, %v211
  %213 = vmatmul.f32.gmra.mxu0 %v186
  %v214 = vpop.f32.mrf.mxu0
  %v215 = vadd.f32 %v170, %v214
  %216 = vmatmul.f32.gmra.mxu0 %v189
  %v217 = vpop.f32.mrf.mxu0
  %v218 = vadd.f32 %v175, %v217
  %219 = vmatmul.f32.gmra.mxu0 %v192
  %v220 = vpop.f32.mrf.mxu0
  %v221 = vadd.f32 %v180, %v220
  %222 = vdwg.mxu0
  %224 = vset.pattern.permute.xlu0 0
  %225 = vperm.xlu0 %224, %v84
  %v226 = vpop.permute.xlu0 %225
  %229 = vset.pattern.permute.xlu0 0
  %230 = vperm.xlu0 %229, %v85
  %v231 = vpop.permute.xlu0 %230
  %234 = vset.pattern.permute.xlu0 0
  %235 = vperm.xlu0 %234, %v86
  %v236 = vpop.permute.xlu0 %235
  %239 = vset.pattern.permute.xlu0 0
  %240 = vperm.xlu0 %239, %v87
  %v241 = vpop.permute.xlu0 %240
  %243 = vmatpush.msra.mxu0 %v74
  %244 = vmatpush.msra.mxu0 %v73
  %245 = vmatpush.msra.mxu0 %v72
  %246 = vmatpush.msra.mxu0 %v71
  %247 = vmatpush.msra.mxu0 %v70
  %248 = vmatpush.msra.mxu0 %v69
  %249 = vmatpush.msra.mxu0 %v68
  %250 = vmatpush.msra.mxu0 %v67
  %251 = vmatpush.msra.mxu0 %v66
  %252 = vmatpush.msra.mxu0 %v65
  %253 = vmatpush.msra.mxu0 %v64
  %254 = vmatpush.msra.mxu0 %v63
  %255 = vmatpush.msra.mxu0 %v62
  %256 = vmatpush.msra.mxu0 %v61
  %257 = vmatpush.msra.mxu0 %v60
  %258 = vmatpush.msra.mxu0 %v59
  %259 = vmatmul.f32.gmra.mxu0 %v212
  %v260 = vpop.f32.mrf.mxu0
  %v261 = vadd.f32 %v226, %v260
  %262 = vmatmul.f32.gmra.mxu0 %v215
  %v263 = vpop.f32.mrf.mxu0
  %v264 = vadd.f32 %v231, %v263
  %265 = vmatmul.f32.gmra.mxu0 %v218
  %v266 = vpop.f32.mrf.mxu0
  %v267 = vadd.f32 %v236, %v266
  %268 = vmatmul.f32.gmra.mxu0 %v221
  %v269 = vpop.f32.mrf.mxu0
  %v270 = vadd.f32 %v241, %v269
  %271 = vdwg.mxu0
  %v272 = vmax.f32 %v261, 0.0
  %v273 = vmax.f32 %v264, 0.0
  %v274 = vmax.f32 %v267, 0.0
  %v275 = vmax.f32 %v270, 0.0
  %v276 = vadd.f32 %v272, %v151
  %v277 = vadd.f32 %v273, %v154
  %v278 = vadd.f32 %v274, %v157
  %v279 = vadd.f32 %v275, %v160
  %v280 = vmax.f32 %v276, 0.0
  %v281 = vmax.f32 %v277, 0.0
  %v282 = vmax.f32 %v278, 0.0
  %v283 = vmax.f32 %v279, 0.0
  %v284 = vld [vmem:[%s7] sm:$0xff]
  %v285 = vld [vmem:[%s7 + $0x8] sm:$0xff]
  %v286 = vld [vmem:[%s7 + $0x10] sm:$0xff]
  %v287 = vld [vmem:[%s7 + $0x18] sm:$0xff]
  %v288 = vld [vmem:[%s8] sm:$0xff]
  %v289 = vld [vmem:[%s8 + $0x8] sm:$0xff]
  %v290 = vld [vmem:[%s8 + $0x10] sm:$0xff]
  %v291 = vld [vmem:[%s8 + $0x18] sm:$0xff]
  %v292 = vld [vmem:[%s9] sm:$0xff]
  %v293 = vld [vmem:[%s9 + $0x8] sm:$0xff]
  %v294 = vld [vmem:[%s9 + $0x10] sm:$0xff]
  %v295 = vld [vmem:[%s9 + $0x18] sm:$0xff]
  %297 = vset.pattern.permute.xlu0 0
  %298 = vperm.xlu0 %297, %v288
  %v299 = vpop.permute.xlu0 %298
  %302 = vset.pattern.permute.xlu0 0
  %303 = vperm.xlu0 %302, %v289
  %v304 = vpop.permute.xlu0 %303
  %307 = vset.pattern.permute.xlu0 0
  %308 = vperm.xlu0 %307, %v290
  %v309 = vpop.permute.xlu0 %308
  %312 = vset.pattern.permute.xlu0 0
  %313 = vperm.xlu0 %312, %v291
  %v314 = vpop.permute.xlu0 %313
  %vm316 = vcmask 261120
  %v318 = vsel %vm316, %v284, 0
  %v321 = vsel %vm316, %v285, 0
  %v324 = vsel %vm316, %v286, 0
  %v327 = vsel %vm316, %v287, 0
  %329 = vmatpush.msra.mxu0 0.0
  %330 = vmatpush.msra.mxu0 0.0
  %331 = vmatpush.msra.mxu0 0.0
  %332 = vmatpush.msra.mxu0 0.0
  %333 = vmatpush.msra.mxu0 0.0
  %334 = vmatpush.msra.mxu0 0.0
  %335 = vmatpush.msra.mxu0 0.0
  %336 = vmatpush.msra.mxu0 0.0
  %337 = vmatpush.msra.mxu0 0.0
  %338 = vmatpush.msra.mxu0 0.0
  %339 = vmatpush.msra.mxu0 0.0
  %340 = vmatpush.msra.mxu0 0.0
  %341 = vmatpush.msra.mxu0 %v283
  %342 = vmatpush.msra.mxu0 %v282
  %343 = vmatpush.msra.mxu0 %v281
  %344 = vmatpush.msra.mxu0 %v280
  %345 = vmatmul.f32.gmra.mxu0 %v318
  %v346 = vpop.f32.mrf.mxu0
  %v347 = vadd.f32 %v299, %v346
  %348 = vmatmul.f32.gmra.mxu0 %v321
  %v349 = vpop.f32.mrf.mxu0
  %v350 = vadd.f32 %v304, %v349
  %351 = vmatmul.f32.gmra.mxu0 %v324
  %v352 = vpop.f32.mrf.mxu0
  %v353 = vadd.f32 %v309, %v352
  %354 = vmatmul.f32.gmra.mxu0 %v327
  %v355 = vpop.f32.mrf.mxu0
  %v356 = vadd.f32 %v314, %v355
  %357 = vdwg.mxu0
  %359 = vset.pattern.permute.xlu0 0
  %360 = vperm.xlu0 %359, %v292
  %v361 = vpop.permute.xlu0 %360
  %364 = vset.pattern.permute.xlu0 0
  %365 = vperm.xlu0 %364, %v293
  %v366 = vpop.permute.xlu0 %365
  %369 = vset.pattern.permute.xlu0 0
  %370 = vperm.xlu0 %369, %v294
  %v371 = vpop.permute.xlu0 %370
  %374 = vset.pattern.permute.xlu0 0
  %375 = vperm.xlu0 %374, %v295
  %v376 = vpop.permute.xlu0 %375
  %378 = vmatpush.msra.mxu0 %v74
  %379 = vmatpush.msra.mxu0 %v73
  %380 = vmatpush.msra.mxu0 %v72
  %381 = vmatpush.msra.mxu0 %v71
  %382 = vmatpush.msra.mxu0 %v70
  %383 = vmatpush.msra.mxu0 %v69
  %384 = vmatpush.msra.mxu0 %v68
  %385 = vmatpush.msra.mxu0 %v67
  %386 = vmatpush.msra.mxu0 %v66
  %387 = vmatpush.msra.mxu0 %v65
  %388 = vmatpush.msra.mxu0 %v64
  %389 = vmatpush.msra.mxu0 %v63
  %390 = vmatpush.msra.mxu0 %v62
  %391 = vmatpush.msra.mxu0 %v61
  %392 = vmatpush.msra.mxu0 %v60
  %393 = vmatpush.msra.mxu0 %v59
  %394 = vmatmul.f32.gmra.mxu0 %v347
  %v395 = vpop.f32.mrf.mxu0
  %v396 = vadd.f32 %v361, %v395
  %397 = vmatmul.f32.gmra.mxu0 %v350
  %v398 = vpop.f32.mrf.mxu0
  %v399 = vadd.f32 %v366, %v398
  %400 = vmatmul.f32.gmra.mxu0 %v353
  %v401 = vpop.f32.mrf.mxu0
  %v402 = vadd.f32 %v371, %v401
  %403 = vmatmul.f32.gmra.mxu0 %v356
  %v404 = vpop.f32.mrf.mxu0
  %v405 = vadd.f32 %v376, %v404
  %406 = vdwg.mxu0
  %v407 = vmax.f32 %v396, 0.0
  %v408 = vmax.f32 %v399, 0.0
  %v409 = vmax.f32 %v402, 0.0
  %v410 = vmax.f32 %v405, 0.0
  %v411 = vadd.f32 %v407, %v280
  %v412 = vadd.f32 %v408, %v281
  %v413 = vadd.f32 %v409, %v282
  %v414 = vadd.f32 %v410, %v283
  %v415 = vmax.f32 %v411, 0.0
  %v416 = vmax.f32 %v412, 0.0
  %v417 = vmax.f32 %v413, 0.0
  %v418 = vmax.f32 %v414, 0.0
  %v419 = vld [vmem:[%s11] sm:$0xf]
  %424 = vrot.lane.b32.xlu0 %v415, 16
  %v425 = vpop.permute.xlu0 %424
  %426 = vrot.lane.b32.xlu0 %v416, 16
  %v427 = vpop.permute.xlu0 %426
  %428 = vrot.lane.b32.xlu0 %v417, 16
  %v429 = vpop.permute.xlu0 %428
  %430 = vrot.lane.b32.xlu0 %v418, 16
  %v431 = vpop.permute.xlu0 %430
  %vm436 = vcmask 130048
  %v437 = vsel %vm436, 0.0, %v425
  %v438 = vsel %vm436, 0.0, %v427
  %v439 = vsel %vm436, 0.0, %v429
  %v440 = vsel %vm436, 0.0, %v431
  %441 = vrot.lane.b32.xlu0 %v415, 112
  %v442 = vpop.permute.xlu0 %441
  %443 = vrot.lane.b32.xlu0 %v416, 112
  %v444 = vpop.permute.xlu0 %443
  %445 = vrot.lane.b32.xlu0 %v417, 112
  %v446 = vpop.permute.xlu0 %445
  %447 = vrot.lane.b32.xlu0 %v418, 112
  %v448 = vpop.permute.xlu0 %447
  %vm453 = vcmask 916480
  %v454 = vsel %vm453, %v442, 0.0
  %v455 = vsel %vm453, %v444, 0.0
  %v456 = vsel %vm453, %v446, 0.0
  %v457 = vsel %vm453, %v448, 0.0
  %v458 = vld [vmem:[%s10] sm:$0xf]
  %s459 = scalar_lea.vmem %s10, 4
  %v460 = vld [vmem:[%s459] sm:$0xf]
  %v462 = vsel %vm316, %v460, 0
  %464 = vmatpush.msra.mxu0 0.0
  %465 = vmatpush.msra.mxu0 0.0
  %466 = vmatpush.msra.mxu0 0.0
  %467 = vmatpush.msra.mxu0 0.0
  %468 = vmatpush.msra.mxu0 0.0
  %469 = vmatpush.msra.mxu0 0.0
  %470 = vmatpush.msra.mxu0 0.0
  %471 = vmatpush.msra.mxu0 0.0
  %472 = vmatpush.msra.mxu0 0.0
  %473 = vmatpush.msra.mxu0 0.0
  %474 = vmatpush.msra.mxu0 0.0
  %475 = vmatpush.msra.mxu0 0.0
  %476 = vmatpush.msra.mxu0 %v418
  %477 = vmatpush.msra.mxu0 %v417
  %478 = vmatpush.msra.mxu0 %v416
  %479 = vmatpush.msra.mxu0 %v415
  %480 = vmatmul.f32.gmra.mxu0 %v462
  %v481 = vpop.f32.mrf.mxu0
  %v482 = vadd.f32 0.0, %v481
  %483 = vdwg.mxu0
  %v485 = vsel %vm316, %v458, 0
  %487 = vmatpush.msra.mxu0 0.0
  %488 = vmatpush.msra.mxu0 0.0
  %489 = vmatpush.msra.mxu0 0.0
  %490 = vmatpush.msra.mxu0 0.0
  %491 = vmatpush.msra.mxu0 0.0
  %492 = vmatpush.msra.mxu0 0.0
  %493 = vmatpush.msra.mxu0 0.0
  %494 = vmatpush.msra.mxu0 0.0
  %495 = vmatpush.msra.mxu0 0.0
  %496 = vmatpush.msra.mxu0 0.0
  %497 = vmatpush.msra.mxu0 0.0
  %498 = vmatpush.msra.mxu0 0.0
  %499 = vmatpush.msra.mxu0 %v440
  %500 = vmatpush.msra.mxu0 %v439
  %501 = vmatpush.msra.mxu0 %v438
  %502 = vmatpush.msra.mxu0 %v437
  %503 = vmatmul.f32.gmra.mxu0 %v485
  %v504 = vpop.f32.mrf.mxu0
  %v505 = vadd.f32 %v482, %v504
  %506 = vdwg.mxu0
  %s507 = scalar_lea.vmem %s10, 8
  %v508 = vld [vmem:[%s507] sm:$0xf]
  %v510 = vsel %vm316, %v508, 0
  %512 = vmatpush.msra.mxu0 0.0
  %513 = vmatpush.msra.mxu0 0.0
  %514 = vmatpush.msra.mxu0 0.0
  %515 = vmatpush.msra.mxu0 0.0
  %516 = vmatpush.msra.mxu0 0.0
  %517 = vmatpush.msra.mxu0 0.0
  %518 = vmatpush.msra.mxu0 0.0
  %519 = vmatpush.msra.mxu0 0.0
  %520 = vmatpush.msra.mxu0 0.0
  %521 = vmatpush.msra.mxu0 0.0
  %522 = vmatpush.msra.mxu0 0.0
  %523 = vmatpush.msra.mxu0 0.0
  %524 = vmatpush.msra.mxu0 %v457
  %525 = vmatpush.msra.mxu0 %v456
  %526 = vmatpush.msra.mxu0 %v455
  %527 = vmatpush.msra.mxu0 %v454
  %528 = vmatmul.f32.gmra.mxu0 %v510
  %v529 = vpop.f32.mrf.mxu0
  %v530 = vadd.f32 0.0, %v529
  %531 = vdwg.mxu0
  %v532 = vadd.f32 %v505, %v530
  %534 = vset.pattern.permute.xlu0 0
  %535 = vperm.xlu0 %534, %v419
  %v536 = vpop.permute.xlu0 %535
  %v538 = vadd.f32 %v532, %v536
  %v539 = vmax.f32 %v538, 0.0
  %v540 = vlaneseq
  %v541 = vshrl.u32 %v540, 7
  %vm542 = vcmp.lt.s32.totalorder %v541, 0
  %v543 = vsub.s32 0, %v541
  %v544 = vsel %vm542, %v543, %v541
  %v545 = vshrl.u32 %v544, 1
  %v546 = vand.u32 %v544, 1
  %v547 = vsub.s32 0, %v546
  %v548 = vsel %vm542, %v547, %v546
  %vm549 = vcmp.ne.s32.totalorder %v548, 0
  %vm550 = vcmp.lt.s32.totalorder %v548, 0
  %vm551 = vmand %vm550, %vm549
  %v552 = vadd.s32 %v548, 2
  %v553 = vsel %vm551, %v552, %v548
  %vm554 = vcmp.ne.s32.totalorder %v553, 1
  %v555 = vsel %vm554, 1, 0
  %v556 = vcvt.s32.f32 %v555
  %vm557 = vcmp.ne.s32.totalorder %v553, 0
  %v558 = vsel %vm557, 1, 0
  %v559 = vcvt.s32.f32 %v558
  %v560 = vld [vmem:[%s13] sm:$0x3]
  %v562 = vrot.slane %v539, 1
  %vm564 = vcmask 1042432
  %v565 = vsel %vm564, %v562, 0.0
  %v566 = vmul.f32 %v565, %v556
  %v567 = vrot.slane %v539, 7
  %vm569 = vcmask 1040384
  %v570 = vsel %vm569, 0.0, %v567
  %v571 = vmul.f32 %v570, %v559
  %v572 = vld [vmem:[%s12] sm:$0xff]
  %v573 = vld [vmem:[%s12 + $0x8] sm:$0xff]
  %v574 = vld [vmem:[%s12 + $0x10] sm:$0xff]
  %v575 = vld [vmem:[%s12 + $0x18] sm:$0xff]
  %v576 = vld [vmem:[%s12 + $0x20] sm:$0xff]
  %v577 = vld [vmem:[%s12 + $0x28] sm:$0xff]
  %v578 = vld [vmem:[%s12 + $0x30] sm:$0xff]
  %v579 = vld [vmem:[%s12 + $0x38] sm:$0xff]
  %v580 = vld [vmem:[%s12 + $0x40] sm:$0xff]
  %v581 = vld [vmem:[%s12 + $0x48] sm:$0xff]
  %v582 = vld [vmem:[%s12 + $0x50] sm:$0xff]
  %v583 = vld [vmem:[%s12 + $0x58] sm:$0xff]
  %v584 = vld [vmem:[%s12 + $0x60] sm:$0xff]
  %v585 = vld [vmem:[%s12 + $0x68] sm:$0xff]
  %v586 = vld [vmem:[%s12 + $0x70] sm:$0xff]
  %v587 = vld [vmem:[%s12 + $0x78] sm:$0xff]
  %v588 = vld [vmem:[%s12 + $0x80] sm:$0xff]
  %v589 = vld [vmem:[%s12 + $0x88] sm:$0xff]
  %v590 = vld [vmem:[%s12 + $0x90] sm:$0xff]
  %v591 = vld [vmem:[%s12 + $0x98] sm:$0xff]
  %v592 = vld [vmem:[%s12 + $0xa0] sm:$0xff]
  %v593 = vld [vmem:[%s12 + $0xa8] sm:$0xff]
  %v594 = vld [vmem:[%s12 + $0xb0] sm:$0xff]
  %v595 = vld [vmem:[%s12 + $0xb8] sm:$0xff]
  %v596 = vld [vmem:[%s12 + $0xc0] sm:$0xff]
  %v597 = vld [vmem:[%s12 + $0xc8] sm:$0xff]
  %v598 = vld [vmem:[%s12 + $0xd0] sm:$0xff]
  %v599 = vld [vmem:[%s12 + $0xd8] sm:$0xff]
  %v600 = vld [vmem:[%s12 + $0xe0] sm:$0xff]
  %v601 = vld [vmem:[%s12 + $0xe8] sm:$0xff]
  %v602 = vld [vmem:[%s12 + $0xf0] sm:$0xff]
  %v603 = vld [vmem:[%s12 + $0xf8] sm:$0xff]
  %s604 = scalar_lea.vmem %s12, 256
  %v605 = vld [vmem:[%s604] sm:$0xff]
  %v606 = vld [vmem:[%s604 + $0x8] sm:$0xff]
  %v607 = vld [vmem:[%s604 + $0x10] sm:$0xff]
  %v608 = vld [vmem:[%s604 + $0x18] sm:$0xff]
  %v609 = vld [vmem:[%s604 + $0x20] sm:$0xff]
  %v610 = vld [vmem:[%s604 + $0x28] sm:$0xff]
  %v611 = vld [vmem:[%s604 + $0x30] sm:$0xff]
  %v612 = vld [vmem:[%s604 + $0x38] sm:$0xff]
  %v613 = vld [vmem:[%s604 + $0x40] sm:$0xff]
  %v614 = vld [vmem:[%s604 + $0x48] sm:$0xff]
  %v615 = vld [vmem:[%s604 + $0x50] sm:$0xff]
  %v616 = vld [vmem:[%s604 + $0x58] sm:$0xff]
  %v617 = vld [vmem:[%s604 + $0x60] sm:$0xff]
  %v618 = vld [vmem:[%s604 + $0x68] sm:$0xff]
  %v619 = vld [vmem:[%s604 + $0x70] sm:$0xff]
  %v620 = vld [vmem:[%s604 + $0x78] sm:$0xff]
  %v621 = vld [vmem:[%s604 + $0x80] sm:$0xff]
  %v622 = vld [vmem:[%s604 + $0x88] sm:$0xff]
  %v623 = vld [vmem:[%s604 + $0x90] sm:$0xff]
  %v624 = vld [vmem:[%s604 + $0x98] sm:$0xff]
  %v625 = vld [vmem:[%s604 + $0xa0] sm:$0xff]
  %v626 = vld [vmem:[%s604 + $0xa8] sm:$0xff]
  %v627 = vld [vmem:[%s604 + $0xb0] sm:$0xff]
  %v628 = vld [vmem:[%s604 + $0xb8] sm:$0xff]
  %v629 = vld [vmem:[%s604 + $0xc0] sm:$0xff]
  %v630 = vld [vmem:[%s604 + $0xc8] sm:$0xff]
  %v631 = vld [vmem:[%s604 + $0xd0] sm:$0xff]
  %v632 = vld [vmem:[%s604 + $0xd8] sm:$0xff]
  %v633 = vld [vmem:[%s604 + $0xe0] sm:$0xff]
  %v634 = vld [vmem:[%s604 + $0xe8] sm:$0xff]
  %v635 = vld [vmem:[%s604 + $0xf0] sm:$0xff]
  %v636 = vld [vmem:[%s604 + $0xf8] sm:$0xff]
  %637 = vmatpush.msra.mxu0 %v635
  %638 = vmatpush.msra.mxu0 %v633
  %639 = vmatpush.msra.mxu0 %v631
  %640 = vmatpush.msra.mxu0 %v629
  %641 = vmatpush.msra.mxu0 %v627
  %642 = vmatpush.msra.mxu0 %v625
  %643 = vmatpush.msra.mxu0 %v623
  %644 = vmatpush.msra.mxu0 %v621
  %645 = vmatpush.msra.mxu0 %v619
  %646 = vmatpush.msra.mxu0 %v617
  %647 = vmatpush.msra.mxu0 %v615
  %648 = vmatpush.msra.mxu0 %v613
  %649 = vmatpush.msra.mxu0 %v611
  %650 = vmatpush.msra.mxu0 %v609
  %651 = vmatpush.msra.mxu0 %v607
  %652 = vmatpush.msra.mxu0 %v605
  %653 = vmatmul.f32.gmra.mxu0 %v539
  %v654 = vpop.f32.mrf.mxu0
  %v655 = vadd.f32 0.0, %v654
  %656 = vdwg.mxu0
  %657 = vmatpush.msra.mxu0 %v636
  %658 = vmatpush.msra.mxu0 %v634
  %659 = vmatpush.msra.mxu0 %v632
  %660 = vmatpush.msra.mxu0 %v630
  %661 = vmatpush.msra.mxu0 %v628
  %662 = vmatpush.msra.mxu0 %v626
  %663 = vmatpush.msra.mxu0 %v624
  %664 = vmatpush.msra.mxu0 %v622
  %665 = vmatpush.msra.mxu0 %v620
  %666 = vmatpush.msra.mxu0 %v618
  %667 = vmatpush.msra.mxu0 %v616
  %668 = vmatpush.msra.mxu0 %v614
  %669 = vmatpush.msra.mxu0 %v612
  %670 = vmatpush.msra.mxu0 %v610
  %671 = vmatpush.msra.mxu0 %v608
  %672 = vmatpush.msra.mxu0 %v606
  %673 = vmatmul.f32.gmra.mxu0 %v539
  %v674 = vpop.f32.mrf.mxu0
  %v675 = vadd.f32 0.0, %v674
  %676 = vdwg.mxu0
  %677 = vmatpush.msra.mxu0 %v602
  %678 = vmatpush.msra.mxu0 %v600
  %679 = vmatpush.msra.mxu0 %v598
  %680 = vmatpush.msra.mxu0 %v596
  %681 = vmatpush.msra.mxu0 %v594
  %682 = vmatpush.msra.mxu0 %v592
  %683 = vmatpush.msra.mxu0 %v590
  %684 = vmatpush.msra.mxu0 %v588
  %685 = vmatpush.msra.mxu0 %v586
  %686 = vmatpush.msra.mxu0 %v584
  %687 = vmatpush.msra.mxu0 %v582
  %688 = vmatpush.msra.mxu0 %v580
  %689 = vmatpush.msra.mxu0 %v578
  %690 = vmatpush.msra.mxu0 %v576
  %691 = vmatpush.msra.mxu0 %v574
  %692 = vmatpush.msra.mxu0 %v572
  %693 = vmatmul.f32.gmra.mxu0 %v571
  %v694 = vpop.f32.mrf.mxu0
  %v695 = vadd.f32 %v655, %v694
  %696 = vdwg.mxu0
  %697 = vmatpush.msra.mxu0 %v603
  %698 = vmatpush.msra.mxu0 %v601
  %699 = vmatpush.msra.mxu0 %v599
  %700 = vmatpush.msra.mxu0 %v597
  %701 = vmatpush.msra.mxu0 %v595
  %702 = vmatpush.msra.mxu0 %v593
  %703 = vmatpush.msra.mxu0 %v591
  %704 = vmatpush.msra.mxu0 %v589
  %705 = vmatpush.msra.mxu0 %v587
  %706 = vmatpush.msra.mxu0 %v585
  %707 = vmatpush.msra.mxu0 %v583
  %708 = vmatpush.msra.mxu0 %v581
  %709 = vmatpush.msra.mxu0 %v579
  %710 = vmatpush.msra.mxu0 %v577
  %711 = vmatpush.msra.mxu0 %v575
  %712 = vmatpush.msra.mxu0 %v573
  %713 = vmatmul.f32.gmra.mxu0 %v571
  %v714 = vpop.f32.mrf.mxu0
  %v715 = vadd.f32 %v675, %v714
  %716 = vdwg.mxu0
  %s717 = scalar_lea.vmem %s12, 512
  %v718 = vld [vmem:[%s717] sm:$0xff]
  %v719 = vld [vmem:[%s717 + $0x8] sm:$0xff]
  %v720 = vld [vmem:[%s717 + $0x10] sm:$0xff]
  %v721 = vld [vmem:[%s717 + $0x18] sm:$0xff]
  %v722 = vld [vmem:[%s717 + $0x20] sm:$0xff]
  %v723 = vld [vmem:[%s717 + $0x28] sm:$0xff]
  %v724 = vld [vmem:[%s717 + $0x30] sm:$0xff]
  %v725 = vld [vmem:[%s717 + $0x38] sm:$0xff]
  %v726 = vld [vmem:[%s717 + $0x40] sm:$0xff]
  %v727 = vld [vmem:[%s717 + $0x48] sm:$0xff]
  %v728 = vld [vmem:[%s717 + $0x50] sm:$0xff]
  %v729 = vld [vmem:[%s717 + $0x58] sm:$0xff]
  %v730 = vld [vmem:[%s717 + $0x60] sm:$0xff]
  %v731 = vld [vmem:[%s717 + $0x68] sm:$0xff]
  %v732 = vld [vmem:[%s717 + $0x70] sm:$0xff]
  %v733 = vld [vmem:[%s717 + $0x78] sm:$0xff]
  %v734 = vld [vmem:[%s717 + $0x80] sm:$0xff]
  %v735 = vld [vmem:[%s717 + $0x88] sm:$0xff]
  %v736 = vld [vmem:[%s717 + $0x90] sm:$0xff]
  %v737 = vld [vmem:[%s717 + $0x98] sm:$0xff]
  %v738 = vld [vmem:[%s717 + $0xa0] sm:$0xff]
  %v739 = vld [vmem:[%s717 + $0xa8] sm:$0xff]
  %v740 = vld [vmem:[%s717 + $0xb0] sm:$0xff]
  %v741 = vld [vmem:[%s717 + $0xb8] sm:$0xff]
  %v742 = vld [vmem:[%s717 + $0xc0] sm:$0xff]
  %v743 = vld [vmem:[%s717 + $0xc8] sm:$0xff]
  %v744 = vld [vmem:[%s717 + $0xd0] sm:$0xff]
  %v745 = vld [vmem:[%s717 + $0xd8] sm:$0xff]
  %v746 = vld [vmem:[%s717 + $0xe0] sm:$0xff]
  %v747 = vld [vmem:[%s717 + $0xe8] sm:$0xff]
  %v748 = vld [vmem:[%s717 + $0xf0] sm:$0xff]
  %v749 = vld [vmem:[%s717 + $0xf8] sm:$0xff]
  %750 = vmatpush.msra.mxu0 %v748
  %751 = vmatpush.msra.mxu0 %v746
  %752 = vmatpush.msra.mxu0 %v744
  %753 = vmatpush.msra.mxu0 %v742
  %754 = vmatpush.msra.mxu0 %v740
  %755 = vmatpush.msra.mxu0 %v738
  %756 = vmatpush.msra.mxu0 %v736
  %757 = vmatpush.msra.mxu0 %v734
  %758 = vmatpush.msra.mxu0 %v732
  %759 = vmatpush.msra.mxu0 %v730
  %760 = vmatpush.msra.mxu0 %v728
  %761 = vmatpush.msra.mxu0 %v726
  %762 = vmatpush.msra.mxu0 %v724
  %763 = vmatpush.msra.mxu0 %v722
  %764 = vmatpush.msra.mxu0 %v720
  %765 = vmatpush.msra.mxu0 %v718
  %766 = vmatmul.f32.gmra.mxu0 %v566
  %v767 = vpop.f32.mrf.mxu0
  %v768 = vadd.f32 0.0, %v767
  %769 = vdwg.mxu0
  %770 = vmatpush.msra.mxu0 %v749
  %771 = vmatpush.msra.mxu0 %v747
  %772 = vmatpush.msra.mxu0 %v745
  %773 = vmatpush.msra.mxu0 %v743
  %774 = vmatpush.msra.mxu0 %v741
  %775 = vmatpush.msra.mxu0 %v739
  %776 = vmatpush.msra.mxu0 %v737
  %777 = vmatpush.msra.mxu0 %v735
  %778 = vmatpush.msra.mxu0 %v733
  %779 = vmatpush.msra.mxu0 %v731
  %780 = vmatpush.msra.mxu0 %v729
  %781 = vmatpush.msra.mxu0 %v727
  %782 = vmatpush.msra.mxu0 %v725
  %783 = vmatpush.msra.mxu0 %v723
  %784 = vmatpush.msra.mxu0 %v721
  %785 = vmatpush.msra.mxu0 %v719
  %786 = vmatmul.f32.gmra.mxu0 %v566
  %v787 = vpop.f32.mrf.mxu0
  %v788 = vadd.f32 0.0, %v787
  %789 = vdwg.mxu0
  %v790 = vadd.f32 %v695, %v768
  %v791 = vadd.f32 %v715, %v788
  %v793 = vperm.slane %v560, 0
  %v794 = vperm.slane %v560, 1
  %v797 = vadd.f32 %v790, %v793
  %v798 = vadd.f32 %v791, %v794
  %v799 = vld [vmem:[%s15] sm:$0x3]
  %v800 = vmax.f32 %v797, 0.0
  %v801 = vmax.f32 %v798, 0.0
  %v804 = vrot.slane %v800, 1
  %v805 = vrot.slane %v801, 1
  %v808 = vsel %vm564, %v804, 0.0
  %v809 = vsel %vm564, %v805, 0.0
  %v810 = vmul.f32 %v808, %v556
  %v811 = vmul.f32 %v809, %v556
  %v812 = vrot.slane %v800, 7
  %v813 = vrot.slane %v801, 7
  %v816 = vsel %vm569, 0.0, %v812
  %v817 = vsel %vm569, 0.0, %v813
  %v818 = vmul.f32 %v816, %v559
  %v819 = vmul.f32 %v817, %v559
  %v820 = vld [vmem:[%s14] sm:$0xff]
  %v821 = vld [vmem:[%s14 + $0x8] sm:$0xff]
  %v822 = vld [vmem:[%s14 + $0x10] sm:$0xff]
  %v823 = vld [vmem:[%s14 + $0x18] sm:$0xff]
  %v824 = vld [vmem:[%s14 + $0x20] sm:$0xff]
  %v825 = vld [vmem:[%s14 + $0x28] sm:$0xff]
  %v826 = vld [vmem:[%s14 + $0x30] sm:$0xff]
  %v827 = vld [vmem:[%s14 + $0x38] sm:$0xff]
  %v828 = vld [vmem:[%s14 + $0x40] sm:$0xff]
  %v829 = vld [vmem:[%s14 + $0x48] sm:$0xff]
  %v830 = vld [vmem:[%s14 + $0x50] sm:$0xff]
  %v831 = vld [vmem:[%s14 + $0x58] sm:$0xff]
  %v832 = vld [vmem:[%s14 + $0x60] sm:$0xff]
  %v833 = vld [vmem:[%s14 + $0x68] sm:$0xff]
  %v834 = vld [vmem:[%s14 + $0x70] sm:$0xff]
  %v835 = vld [vmem:[%s14 + $0x78] sm:$0xff]
  %v836 = vld [vmem:[%s14 + $0x80] sm:$0xff]
  %v837 = vld [vmem:[%s14 + $0x88] sm:$0xff]
  %v838 = vld [vmem:[%s14 + $0x90] sm:$0xff]
  %v839 = vld [vmem:[%s14 + $0x98] sm:$0xff]
  %v840 = vld [vmem:[%s14 + $0xa0] sm:$0xff]
  %v841 = vld [vmem:[%s14 + $0xa8] sm:$0xff]
  %v842 = vld [vmem:[%s14 + $0xb0] sm:$0xff]
  %v843 = vld [vmem:[%s14 + $0xb8] sm:$0xff]
  %v844 = vld [vmem:[%s14 + $0xc0] sm:$0xff]
  %v845 = vld [vmem:[%s14 + $0xc8] sm:$0xff]
  %v846 = vld [vmem:[%s14 + $0xd0] sm:$0xff]
  %v847 = vld [vmem:[%s14 + $0xd8] sm:$0xff]
  %v848 = vld [vmem:[%s14 + $0xe0] sm:$0xff]
  %v849 = vld [vmem:[%s14 + $0xe8] sm:$0xff]
  %v850 = vld [vmem:[%s14 + $0xf0] sm:$0xff]
  %v851 = vld [vmem:[%s14 + $0xf8] sm:$0xff]
  %v852 = vld [vmem:[%s14 + $0x100] sm:$0xff]
  %v853 = vld [vmem:[%s14 + $0x108] sm:$0xff]
  %v854 = vld [vmem:[%s14 + $0x110] sm:$0xff]
  %v855 = vld [vmem:[%s14 + $0x118] sm:$0xff]
  %v856 = vld [vmem:[%s14 + $0x120] sm:$0xff]
  %v857 = vld [vmem:[%s14 + $0x128] sm:$0xff]
  %v858 = vld [vmem:[%s14 + $0x130] sm:$0xff]
  %v859 = vld [vmem:[%s14 + $0x138] sm:$0xff]
  %s860 = scalar_lea.vmem %s14, 320
  %v861 = vld [vmem:[%s860] sm:$0xff]
  %v862 = vld [vmem:[%s860 + $0x8] sm:$0xff]
  %v863 = vld [vmem:[%s860 + $0x10] sm:$0xff]
  %v864 = vld [vmem:[%s860 + $0x18] sm:$0xff]
  %v865 = vld [vmem:[%s860 + $0x20] sm:$0xff]
  %v866 = vld [vmem:[%s860 + $0x28] sm:$0xff]
  %v867 = vld [vmem:[%s860 + $0x30] sm:$0xff]
  %v868 = vld [vmem:[%s860 + $0x38] sm:$0xff]
  %v869 = vld [vmem:[%s860 + $0x40] sm:$0xff]
  %v870 = vld [vmem:[%s860 + $0x48] sm:$0xff]
  %v871 = vld [vmem:[%s860 + $0x50] sm:$0xff]
  %v872 = vld [vmem:[%s860 + $0x58] sm:$0xff]
  %v873 = vld [vmem:[%s860 + $0x60] sm:$0xff]
  %v874 = vld [vmem:[%s860 + $0x68] sm:$0xff]
  %v875 = vld [vmem:[%s860 + $0x70] sm:$0xff]
  %v876 = vld [vmem:[%s860 + $0x78] sm:$0xff]
  %v877 = vld [vmem:[%s860 + $0x80] sm:$0xff]
  %v878 = vld [vmem:[%s860 + $0x88] sm:$0xff]
  %v879 = vld [vmem:[%s860 + $0x90] sm:$0xff]
  %v880 = vld [vmem:[%s860 + $0x98] sm:$0xff]
  %v881 = vld [vmem:[%s860 + $0xa0] sm:$0xff]
  %v882 = vld [vmem:[%s860 + $0xa8] sm:$0xff]
  %v883 = vld [vmem:[%s860 + $0xb0] sm:$0xff]
  %v884 = vld [vmem:[%s860 + $0xb8] sm:$0xff]
  %v885 = vld [vmem:[%s860 + $0xc0] sm:$0xff]
  %v886 = vld [vmem:[%s860 + $0xc8] sm:$0xff]
  %v887 = vld [vmem:[%s860 + $0xd0] sm:$0xff]
  %v888 = vld [vmem:[%s860 + $0xd8] sm:$0xff]
  %v889 = vld [vmem:[%s860 + $0xe0] sm:$0xff]
  %v890 = vld [vmem:[%s860 + $0xe8] sm:$0xff]
  %v891 = vld [vmem:[%s860 + $0xf0] sm:$0xff]
  %v892 = vld [vmem:[%s860 + $0xf8] sm:$0xff]
  %v893 = vld [vmem:[%s860 + $0x100] sm:$0xff]
  %v894 = vld [vmem:[%s860 + $0x108] sm:$0xff]
  %v895 = vld [vmem:[%s860 + $0x110] sm:$0xff]
  %v896 = vld [vmem:[%s860 + $0x118] sm:$0xff]
  %v897 = vld [vmem:[%s860 + $0x120] sm:$0xff]
  %v898 = vld [vmem:[%s860 + $0x128] sm:$0xff]
  %v899 = vld [vmem:[%s860 + $0x130] sm:$0xff]
  %v900 = vld [vmem:[%s860 + $0x138] sm:$0xff]
  %v901 = vsel %vm316, %v801, 0
  %903 = vmatpush.msra.mxu0 %v891
  %904 = vmatpush.msra.mxu0 %v889
  %905 = vmatpush.msra.mxu0 %v887
  %906 = vmatpush.msra.mxu0 %v885
  %907 = vmatpush.msra.mxu0 %v883
  %908 = vmatpush.msra.mxu0 %v881
  %909 = vmatpush.msra.mxu0 %v879
  %910 = vmatpush.msra.mxu0 %v877
  %911 = vmatpush.msra.mxu0 %v875
  %912 = vmatpush.msra.mxu0 %v873
  %913 = vmatpush.msra.mxu0 %v871
  %914 = vmatpush.msra.mxu0 %v869
  %915 = vmatpush.msra.mxu0 %v867
  %916 = vmatpush.msra.mxu0 %v865
  %917 = vmatpush.msra.mxu0 %v863
  %918 = vmatpush.msra.mxu0 %v861
  %919 = vmatmul.f32.gmra.mxu0 %v800
  %v920 = vpop.f32.mrf.mxu0
  %v921 = vadd.f32 0.0, %v920
  %922 = vdwg.mxu0
  %923 = vmatpush.msra.mxu0 0.0
  %924 = vmatpush.msra.mxu0 0.0
  %925 = vmatpush.msra.mxu0 0.0
  %926 = vmatpush.msra.mxu0 0.0
  %927 = vmatpush.msra.mxu0 0.0
  %928 = vmatpush.msra.mxu0 0.0
  %929 = vmatpush.msra.mxu0 0.0
  %930 = vmatpush.msra.mxu0 0.0
  %931 = vmatpush.msra.mxu0 0.0
  %932 = vmatpush.msra.mxu0 0.0
  %933 = vmatpush.msra.mxu0 0.0
  %934 = vmatpush.msra.mxu0 0.0
  %935 = vmatpush.msra.mxu0 %v899
  %936 = vmatpush.msra.mxu0 %v897
  %937 = vmatpush.msra.mxu0 %v895
  %938 = vmatpush.msra.mxu0 %v893
  %939 = vmatmul.f32.gmra.mxu0 %v901
  %v940 = vpop.f32.mrf.mxu0
  %v941 = vadd.f32 %v921, %v940
  %942 = vdwg.mxu0
  %943 = vmatpush.msra.mxu0 %v892
  %944 = vmatpush.msra.mxu0 %v890
  %945 = vmatpush.msra.mxu0 %v888
  %946 = vmatpush.msra.mxu0 %v886
  %947 = vmatpush.msra.mxu0 %v884
  %948 = vmatpush.msra.mxu0 %v882
  %949 = vmatpush.msra.mxu0 %v880
  %950 = vmatpush.msra.mxu0 %v878
  %951 = vmatpush.msra.mxu0 %v876
  %952 = vmatpush.msra.mxu0 %v874
  %953 = vmatpush.msra.mxu0 %v872
  %954 = vmatpush.msra.mxu0 %v870
  %955 = vmatpush.msra.mxu0 %v868
  %956 = vmatpush.msra.mxu0 %v866
  %957 = vmatpush.msra.mxu0 %v864
  %958 = vmatpush.msra.mxu0 %v862
  %959 = vmatmul.f32.gmra.mxu0 %v800
  %v960 = vpop.f32.mrf.mxu0
  %v961 = vadd.f32 0.0, %v960
  %962 = vdwg.mxu0
  %963 = vmatpush.msra.mxu0 0.0
  %964 = vmatpush.msra.mxu0 0.0
  %965 = vmatpush.msra.mxu0 0.0
  %966 = vmatpush.msra.mxu0 0.0
  %967 = vmatpush.msra.mxu0 0.0
  %968 = vmatpush.msra.mxu0 0.0
  %969 = vmatpush.msra.mxu0 0.0
  %970 = vmatpush.msra.mxu0 0.0
  %971 = vmatpush.msra.mxu0 0.0
  %972 = vmatpush.msra.mxu0 0.0
  %973 = vmatpush.msra.mxu0 0.0
  %974 = vmatpush.msra.mxu0 0.0
  %975 = vmatpush.msra.mxu0 %v900
  %976 = vmatpush.msra.mxu0 %v898
  %977 = vmatpush.msra.mxu0 %v896
  %978 = vmatpush.msra.mxu0 %v894
  %979 = vmatmul.f32.gmra.mxu0 %v901
  %v980 = vpop.f32.mrf.mxu0
  %v981 = vadd.f32 %v961, %v980
  %982 = vdwg.mxu0
  %v984 = vsel %vm316, %v819, 0
  %986 = vmatpush.msra.mxu0 %v850
  %987 = vmatpush.msra.mxu0 %v848
  %988 = vmatpush.msra.mxu0 %v846
  %989 = vmatpush.msra.mxu0 %v844
  %990 = vmatpush.msra.mxu0 %v842
  %991 = vmatpush.msra.mxu0 %v840
  %992 = vmatpush.msra.mxu0 %v838
  %993 = vmatpush.msra.mxu0 %v836
  %994 = vmatpush.msra.mxu0 %v834
  %995 = vmatpush.msra.mxu0 %v832
  %996 = vmatpush.msra.mxu0 %v830
  %997 = vmatpush.msra.mxu0 %v828
  %998 = vmatpush.msra.mxu0 %v826
  %999 = vmatpush.msra.mxu0 %v824
  %1000 = vmatpush.msra.mxu0 %v822
  %1001 = vmatpush.msra.mxu0 %v820
  %1002 = vmatmul.f32.gmra.mxu0 %v818
  %v1003 = vpop.f32.mrf.mxu0
  %v1004 = vadd.f32 %v941, %v1003
  %1005 = vdwg.mxu0
  %1006 = vmatpush.msra.mxu0 0.0
  %1007 = vmatpush.msra.mxu0 0.0
  %1008 = vmatpush.msra.mxu0 0.0
  %1009 = vmatpush.msra.mxu0 0.0
  %1010 = vmatpush.msra.mxu0 0.0
  %1011 = vmatpush.msra.mxu0 0.0
  %1012 = vmatpush.msra.mxu0 0.0
  %1013 = vmatpush.msra.mxu0 0.0
  %1014 = vmatpush.msra.mxu0 0.0
  %1015 = vmatpush.msra.mxu0 0.0
  %1016 = vmatpush.msra.mxu0 0.0
  %1017 = vmatpush.msra.mxu0 0.0
  %1018 = vmatpush.msra.mxu0 %v858
  %1019 = vmatpush.msra.mxu0 %v856
  %1020 = vmatpush.msra.mxu0 %v854
  %1021 = vmatpush.msra.mxu0 %v852
  %1022 = vmatmul.f32.gmra.mxu0 %v984
  %v1023 = vpop.f32.mrf.mxu0
  %v1024 = vadd.f32 %v1004, %v1023
  %1025 = vdwg.mxu0
  %1026 = vmatpush.msra.mxu0 %v851
  %1027 = vmatpush.msra.mxu0 %v849
  %1028 = vmatpush.msra.mxu0 %v847
  %1029 = vmatpush.msra.mxu0 %v845
  %1030 = vmatpush.msra.mxu0 %v843
  %1031 = vmatpush.msra.mxu0 %v841
  %1032 = vmatpush.msra.mxu0 %v839
  %1033 = vmatpush.msra.mxu0 %v837
  %1034 = vmatpush.msra.mxu0 %v835
  %1035 = vmatpush.msra.mxu0 %v833
  %1036 = vmatpush.msra.mxu0 %v831
  %1037 = vmatpush.msra.mxu0 %v829
  %1038 = vmatpush.msra.mxu0 %v827
  %1039 = vmatpush.msra.mxu0 %v825
  %1040 = vmatpush.msra.mxu0 %v823
  %1041 = vmatpush.msra.mxu0 %v821
  %1042 = vmatmul.f32.gmra.mxu0 %v818
  %v1043 = vpop.f32.mrf.mxu0
  %v1044 = vadd.f32 %v981, %v1043
  %1045 = vdwg.mxu0
  %1046 = vmatpush.msra.mxu0 0.0
  %1047 = vmatpush.msra.mxu0 0.0
  %1048 = vmatpush.msra.mxu0 0.0
  %1049 = vmatpush.msra.mxu0 0.0
  %1050 = vmatpush.msra.mxu0 0.0
  %1051 = vmatpush.msra.mxu0 0.0
  %1052 = vmatpush.msra.mxu0 0.0
  %1053 = vmatpush.msra.mxu0 0.0
  %1054 = vmatpush.msra.mxu0 0.0
  %1055 = vmatpush.msra.mxu0 0.0
  %1056 = vmatpush.msra.mxu0 0.0
  %1057 = vmatpush.msra.mxu0 0.0
  %1058 = vmatpush.msra.mxu0 %v859
  %1059 = vmatpush.msra.mxu0 %v857
  %1060 = vmatpush.msra.mxu0 %v855
  %1061 = vmatpush.msra.mxu0 %v853
  %1062 = vmatmul.f32.gmra.mxu0 %v984
  %v1063 = vpop.f32.mrf.mxu0
  %v1064 = vadd.f32 %v1044, %v1063
  %1065 = vdwg.mxu0
  %s1066 = scalar_lea.vmem %s14, 640
  %v1067 = vld [vmem:[%s1066] sm:$0xff]
  %v1068 = vld [vmem:[%s1066 + $0x8] sm:$0xff]
  %v1069 = vld [vmem:[%s1066 + $0x10] sm:$0xff]
  %v1070 = vld [vmem:[%s1066 + $0x18] sm:$0xff]
  %v1071 = vld [vmem:[%s1066 + $0x20] sm:$0xff]
  %v1072 = vld [vmem:[%s1066 + $0x28] sm:$0xff]
  %v1073 = vld [vmem:[%s1066 + $0x30] sm:$0xff]
  %v1074 = vld [vmem:[%s1066 + $0x38] sm:$0xff]
  %v1075 = vld [vmem:[%s1066 + $0x40] sm:$0xff]
  %v1076 = vld [vmem:[%s1066 + $0x48] sm:$0xff]
  %v1077 = vld [vmem:[%s1066 + $0x50] sm:$0xff]
  %v1078 = vld [vmem:[%s1066 + $0x58] sm:$0xff]
  %v1079 = vld [vmem:[%s1066 + $0x60] sm:$0xff]
  %v1080 = vld [vmem:[%s1066 + $0x68] sm:$0xff]
  %v1081 = vld [vmem:[%s1066 + $0x70] sm:$0xff]
  %v1082 = vld [vmem:[%s1066 + $0x78] sm:$0xff]
  %v1083 = vld [vmem:[%s1066 + $0x80] sm:$0xff]
  %v1084 = vld [vmem:[%s1066 + $0x88] sm:$0xff]
  %v1085 = vld [vmem:[%s1066 + $0x90] sm:$0xff]
  %v1086 = vld [vmem:[%s1066 + $0x98] sm:$0xff]
  %v1087 = vld [vmem:[%s1066 + $0xa0] sm:$0xff]
  %v1088 = vld [vmem:[%s1066 + $0xa8] sm:$0xff]
  %v1089 = vld [vmem:[%s1066 + $0xb0] sm:$0xff]
  %v1090 = vld [vmem:[%s1066 + $0xb8] sm:$0xff]
  %v1091 = vld [vmem:[%s1066 + $0xc0] sm:$0xff]
  %v1092 = vld [vmem:[%s1066 + $0xc8] sm:$0xff]
  %v1093 = vld [vmem:[%s1066 + $0xd0] sm:$0xff]
  %v1094 = vld [vmem:[%s1066 + $0xd8] sm:$0xff]
  %v1095 = vld [vmem:[%s1066 + $0xe0] sm:$0xff]
  %v1096 = vld [vmem:[%s1066 + $0xe8] sm:$0xff]
  %v1097 = vld [vmem:[%s1066 + $0xf0] sm:$0xff]
  %v1098 = vld [vmem:[%s1066 + $0xf8] sm:$0xff]
  %v1099 = vld [vmem:[%s1066 + $0x100] sm:$0xff]
  %v1100 = vld [vmem:[%s1066 + $0x108] sm:$0xff]
  %v1101 = vld [vmem:[%s1066 + $0x110] sm:$0xff]
  %v1102 = vld [vmem:[%s1066 + $0x118] sm:$0xff]
  %v1103 = vld [vmem:[%s1066 + $0x120] sm:$0xff]
  %v1104 = vld [vmem:[%s1066 + $0x128] sm:$0xff]
  %v1105 = vld [vmem:[%s1066 + $0x130] sm:$0xff]
  %v1106 = vld [vmem:[%s1066 + $0x138] sm:$0xff]
  %v1108 = vsel %vm316, %v811, 0
  %1110 = vmatpush.msra.mxu0 %v1097
  %1111 = vmatpush.msra.mxu0 %v1095
  %1112 = vmatpush.msra.mxu0 %v1093
  %1113 = vmatpush.msra.mxu0 %v1091
  %1114 = vmatpush.msra.mxu0 %v1089
  %1115 = vmatpush.msra.mxu0 %v1087
  %1116 = vmatpush.msra.mxu0 %v1085
  %1117 = vmatpush.msra.mxu0 %v1083
  %1118 = vmatpush.msra.mxu0 %v1081
  %1119 = vmatpush.msra.mxu0 %v1079
  %1120 = vmatpush.msra.mxu0 %v1077
  %1121 = vmatpush.msra.mxu0 %v1075
  %1122 = vmatpush.msra.mxu0 %v1073
  %1123 = vmatpush.msra.mxu0 %v1071
  %1124 = vmatpush.msra.mxu0 %v1069
  %1125 = vmatpush.msra.mxu0 %v1067
  %1126 = vmatmul.f32.gmra.mxu0 %v810
  %v1127 = vpop.f32.mrf.mxu0
  %v1128 = vadd.f32 0.0, %v1127
  %1129 = vdwg.mxu0
  %1130 = vmatpush.msra.mxu0 0.0
  %1131 = vmatpush.msra.mxu0 0.0
  %1132 = vmatpush.msra.mxu0 0.0
  %1133 = vmatpush.msra.mxu0 0.0
  %1134 = vmatpush.msra.mxu0 0.0
  %1135 = vmatpush.msra.mxu0 0.0
  %1136 = vmatpush.msra.mxu0 0.0
  %1137 = vmatpush.msra.mxu0 0.0
  %1138 = vmatpush.msra.mxu0 0.0
  %1139 = vmatpush.msra.mxu0 0.0
  %1140 = vmatpush.msra.mxu0 0.0
  %1141 = vmatpush.msra.mxu0 0.0
  %1142 = vmatpush.msra.mxu0 %v1105
  %1143 = vmatpush.msra.mxu0 %v1103
  %1144 = vmatpush.msra.mxu0 %v1101
  %1145 = vmatpush.msra.mxu0 %v1099
  %1146 = vmatmul.f32.gmra.mxu0 %v1108
  %v1147 = vpop.f32.mrf.mxu0
  %v1148 = vadd.f32 %v1128, %v1147
  %1149 = vdwg.mxu0
  %1150 = vmatpush.msra.mxu0 %v1098
  %1151 = vmatpush.msra.mxu0 %v1096
  %1152 = vmatpush.msra.mxu0 %v1094
  %1153 = vmatpush.msra.mxu0 %v1092
  %1154 = vmatpush.msra.mxu0 %v1090
  %1155 = vmatpush.msra.mxu0 %v1088
  %1156 = vmatpush.msra.mxu0 %v1086
  %1157 = vmatpush.msra.mxu0 %v1084
  %1158 = vmatpush.msra.mxu0 %v1082
  %1159 = vmatpush.msra.mxu0 %v1080
  %1160 = vmatpush.msra.mxu0 %v1078
  %1161 = vmatpush.msra.mxu0 %v1076
  %1162 = vmatpush.msra.mxu0 %v1074
  %1163 = vmatpush.msra.mxu0 %v1072
  %1164 = vmatpush.msra.mxu0 %v1070
  %1165 = vmatpush.msra.mxu0 %v1068
  %1166 = vmatmul.f32.gmra.mxu0 %v810
  %v1167 = vpop.f32.mrf.mxu0
  %v1168 = vadd.f32 0.0, %v1167
  %1169 = vdwg.mxu0
  %1170 = vmatpush.msra.mxu0 0.0
  %1171 = vmatpush.msra.mxu0 0.0
  %1172 = vmatpush.msra.mxu0 0.0
  %1173 = vmatpush.msra.mxu0 0.0
  %1174 = vmatpush.msra.mxu0 0.0
  %1175 = vmatpush.msra.mxu0 0.0
  %1176 = vmatpush.msra.mxu0 0.0
  %1177 = vmatpush.msra.mxu0 0.0
  %1178 = vmatpush.msra.mxu0 0.0
  %1179 = vmatpush.msra.mxu0 0.0
  %1180 = vmatpush.msra.mxu0 0.0
  %1181 = vmatpush.msra.mxu0 0.0
  %1182 = vmatpush.msra.mxu0 %v1106
  %1183 = vmatpush.msra.mxu0 %v1104
  %1184 = vmatpush.msra.mxu0 %v1102
  %1185 = vmatpush.msra.mxu0 %v1100
  %1186 = vmatmul.f32.gmra.mxu0 %v1108
  %v1187 = vpop.f32.mrf.mxu0
  %v1188 = vadd.f32 %v1168, %v1187
  %1189 = vdwg.mxu0
  %v1190 = vadd.f32 %v1024, %v1148
  %v1191 = vadd.f32 %v1064, %v1188
  %v1193 = vperm.slane %v799, 0
  %v1194 = vperm.slane %v799, 1
  %v1197 = vadd.f32 %v1190, %v1193
  %v1198 = vadd.f32 %v1191, %v1194
  %v1199 = vadd.f32 %v1197, %v800
  %v1200 = vadd.f32 %v1198, %v801
  %v1201 = vld [vmem:[%s17] sm:$0x3]
  %v1202 = vmax.f32 %v1199, 0.0
  %v1203 = vmax.f32 %v1200, 0.0
  %v1206 = vrot.slane %v1202, 1
  %v1207 = vrot.slane %v1203, 1
  %v1210 = vsel %vm564, %v1206, 0.0
  %v1211 = vsel %vm564, %v1207, 0.0
  %v1212 = vmul.f32 %v1210, %v556
  %v1213 = vmul.f32 %v1211, %v556
  %v1214 = vrot.slane %v1202, 7
  %v1215 = vrot.slane %v1203, 7
  %v1218 = vsel %vm569, 0.0, %v1214
  %v1219 = vsel %vm569, 0.0, %v1215
  %v1220 = vmul.f32 %v1218, %v559
  %v1221 = vmul.f32 %v1219, %v559
  %v1222 = vld [vmem:[%s16] sm:$0xff]
  %v1223 = vld [vmem:[%s16 + $0x8] sm:$0xff]
  %v1224 = vld [vmem:[%s16 + $0x10] sm:$0xff]
  %v1225 = vld [vmem:[%s16 + $0x18] sm:$0xff]
  %v1226 = vld [vmem:[%s16 + $0x20] sm:$0xff]
  %v1227 = vld [vmem:[%s16 + $0x28] sm:$0xff]
  %v1228 = vld [vmem:[%s16 + $0x30] sm:$0xff]
  %v1229 = vld [vmem:[%s16 + $0x38] sm:$0xff]
  %v1230 = vld [vmem:[%s16 + $0x40] sm:$0xff]
  %v1231 = vld [vmem:[%s16 + $0x48] sm:$0xff]
  %v1232 = vld [vmem:[%s16 + $0x50] sm:$0xff]
  %v1233 = vld [vmem:[%s16 + $0x58] sm:$0xff]
  %v1234 = vld [vmem:[%s16 + $0x60] sm:$0xff]
  %v1235 = vld [vmem:[%s16 + $0x68] sm:$0xff]
  %v1236 = vld [vmem:[%s16 + $0x70] sm:$0xff]
  %v1237 = vld [vmem:[%s16 + $0x78] sm:$0xff]
  %v1238 = vld [vmem:[%s16 + $0x80] sm:$0xff]
  %v1239 = vld [vmem:[%s16 + $0x88] sm:$0xff]
  %v1240 = vld [vmem:[%s16 + $0x90] sm:$0xff]
  %v1241 = vld [vmem:[%s16 + $0x98] sm:$0xff]
  %v1242 = vld [vmem:[%s16 + $0xa0] sm:$0xff]
  %v1243 = vld [vmem:[%s16 + $0xa8] sm:$0xff]
  %v1244 = vld [vmem:[%s16 + $0xb0] sm:$0xff]
  %v1245 = vld [vmem:[%s16 + $0xb8] sm:$0xff]
  %v1246 = vld [vmem:[%s16 + $0xc0] sm:$0xff]
  %v1247 = vld [vmem:[%s16 + $0xc8] sm:$0xff]
  %v1248 = vld [vmem:[%s16 + $0xd0] sm:$0xff]
  %v1249 = vld [vmem:[%s16 + $0xd8] sm:$0xff]
  %v1250 = vld [vmem:[%s16 + $0xe0] sm:$0xff]
  %v1251 = vld [vmem:[%s16 + $0xe8] sm:$0xff]
  %v1252 = vld [vmem:[%s16 + $0xf0] sm:$0xff]
  %v1253 = vld [vmem:[%s16 + $0xf8] sm:$0xff]
  %v1254 = vld [vmem:[%s16 + $0x100] sm:$0xff]
  %v1255 = vld [vmem:[%s16 + $0x108] sm:$0xff]
  %v1256 = vld [vmem:[%s16 + $0x110] sm:$0xff]
  %v1257 = vld [vmem:[%s16 + $0x118] sm:$0xff]
  %v1258 = vld [vmem:[%s16 + $0x120] sm:$0xff]
  %v1259 = vld [vmem:[%s16 + $0x128] sm:$0xff]
  %v1260 = vld [vmem:[%s16 + $0x130] sm:$0xff]
  %v1261 = vld [vmem:[%s16 + $0x138] sm:$0xff]
  %s1262 = scalar_lea.vmem %s16, 320
  %v1263 = vld [vmem:[%s1262] sm:$0xff]
  %v1264 = vld [vmem:[%s1262 + $0x8] sm:$0xff]
  %v1265 = vld [vmem:[%s1262 + $0x10] sm:$0xff]
  %v1266 = vld [vmem:[%s1262 + $0x18] sm:$0xff]
  %v1267 = vld [vmem:[%s1262 + $0x20] sm:$0xff]
  %v1268 = vld [vmem:[%s1262 + $0x28] sm:$0xff]
  %v1269 = vld [vmem:[%s1262 + $0x30] sm:$0xff]
  %v1270 = vld [vmem:[%s1262 + $0x38] sm:$0xff]
  %v1271 = vld [vmem:[%s1262 + $0x40] sm:$0xff]
  %v1272 = vld [vmem:[%s1262 + $0x48] sm:$0xff]
  %v1273 = vld [vmem:[%s1262 + $0x50] sm:$0xff]
  %v1274 = vld [vmem:[%s1262 + $0x58] sm:$0xff]
  %v1275 = vld [vmem:[%s1262 + $0x60] sm:$0xff]
  %v1276 = vld [vmem:[%s1262 + $0x68] sm:$0xff]
  %v1277 = vld [vmem:[%s1262 + $0x70] sm:$0xff]
  %v1278 = vld [vmem:[%s1262 + $0x78] sm:$0xff]
  %v1279 = vld [vmem:[%s1262 + $0x80] sm:$0xff]
  %v1280 = vld [vmem:[%s1262 + $0x88] sm:$0xff]
  %v1281 = vld [vmem:[%s1262 + $0x90] sm:$0xff]
  %v1282 = vld [vmem:[%s1262 + $0x98] sm:$0xff]
  %v1283 = vld [vmem:[%s1262 + $0xa0] sm:$0xff]
  %v1284 = vld [vmem:[%s1262 + $0xa8] sm:$0xff]
  %v1285 = vld [vmem:[%s1262 + $0xb0] sm:$0xff]
  %v1286 = vld [vmem:[%s1262 + $0xb8] sm:$0xff]
  %v1287 = vld [vmem:[%s1262 + $0xc0] sm:$0xff]
  %v1288 = vld [vmem:[%s1262 + $0xc8] sm:$0xff]
  %v1289 = vld [vmem:[%s1262 + $0xd0] sm:$0xff]
  %v1290 = vld [vmem:[%s1262 + $0xd8] sm:$0xff]
  %v1291 = vld [vmem:[%s1262 + $0xe0] sm:$0xff]
  %v1292 = vld [vmem:[%s1262 + $0xe8] sm:$0xff]
  %v1293 = vld [vmem:[%s1262 + $0xf0] sm:$0xff]
  %v1294 = vld [vmem:[%s1262 + $0xf8] sm:$0xff]
  %v1295 = vld [vmem:[%s1262 + $0x100] sm:$0xff]
  %v1296 = vld [vmem:[%s1262 + $0x108] sm:$0xff]
  %v1297 = vld [vmem:[%s1262 + $0x110] sm:$0xff]
  %v1298 = vld [vmem:[%s1262 + $0x118] sm:$0xff]
  %v1299 = vld [vmem:[%s1262 + $0x120] sm:$0xff]
  %v1300 = vld [vmem:[%s1262 + $0x128] sm:$0xff]
  %v1301 = vld [vmem:[%s1262 + $0x130] sm:$0xff]
  %v1302 = vld [vmem:[%s1262 + $0x138] sm:$0xff]
  %v1303 = vsel %vm316, %v1203, 0
  %1305 = vmatpush.msra.mxu0 %v1293
  %1306 = vmatpush.msra.mxu0 %v1291
  %1307 = vmatpush.msra.mxu0 %v1289
  %1308 = vmatpush.msra.mxu0 %v1287
  %1309 = vmatpush.msra.mxu0 %v1285
  %1310 = vmatpush.msra.mxu0 %v1283
  %1311 = vmatpush.msra.mxu0 %v1281
  %1312 = vmatpush.msra.mxu0 %v1279
  %1313 = vmatpush.msra.mxu0 %v1277
  %1314 = vmatpush.msra.mxu0 %v1275
  %1315 = vmatpush.msra.mxu0 %v1273
  %1316 = vmatpush.msra.mxu0 %v1271
  %1317 = vmatpush.msra.mxu0 %v1269
  %1318 = vmatpush.msra.mxu0 %v1267
  %1319 = vmatpush.msra.mxu0 %v1265
  %1320 = vmatpush.msra.mxu0 %v1263
  %1321 = vmatmul.f32.gmra.mxu0 %v1202
  %v1322 = vpop.f32.mrf.mxu0
  %v1323 = vadd.f32 0.0, %v1322
  %1324 = vdwg.mxu0
  %1325 = vmatpush.msra.mxu0 0.0
  %1326 = vmatpush.msra.mxu0 0.0
  %1327 = vmatpush.msra.mxu0 0.0
  %1328 = vmatpush.msra.mxu0 0.0
  %1329 = vmatpush.msra.mxu0 0.0
  %1330 = vmatpush.msra.mxu0 0.0
  %1331 = vmatpush.msra.mxu0 0.0
  %1332 = vmatpush.msra.mxu0 0.0
  %1333 = vmatpush.msra.mxu0 0.0
  %1334 = vmatpush.msra.mxu0 0.0
  %1335 = vmatpush.msra.mxu0 0.0
  %1336 = vmatpush.msra.mxu0 0.0
  %1337 = vmatpush.msra.mxu0 %v1301
  %1338 = vmatpush.msra.mxu0 %v1299
  %1339 = vmatpush.msra.mxu0 %v1297
  %1340 = vmatpush.msra.mxu0 %v1295
  %1341 = vmatmul.f32.gmra.mxu0 %v1303
  %v1342 = vpop.f32.mrf.mxu0
  %v1343 = vadd.f32 %v1323, %v1342
  %1344 = vdwg.mxu0
  %1345 = vmatpush.msra.mxu0 %v1294
  %1346 = vmatpush.msra.mxu0 %v1292
  %1347 = vmatpush.msra.mxu0 %v1290
  %1348 = vmatpush.msra.mxu0 %v1288
  %1349 = vmatpush.msra.mxu0 %v1286
  %1350 = vmatpush.msra.mxu0 %v1284
  %1351 = vmatpush.msra.mxu0 %v1282
  %1352 = vmatpush.msra.mxu0 %v1280
  %1353 = vmatpush.msra.mxu0 %v1278
  %1354 = vmatpush.msra.mxu0 %v1276
  %1355 = vmatpush.msra.mxu0 %v1274
  %1356 = vmatpush.msra.mxu0 %v1272
  %1357 = vmatpush.msra.mxu0 %v1270
  %1358 = vmatpush.msra.mxu0 %v1268
  %1359 = vmatpush.msra.mxu0 %v1266
  %1360 = vmatpush.msra.mxu0 %v1264
  %1361 = vmatmul.f32.gmra.mxu0 %v1202
  %v1362 = vpop.f32.mrf.mxu0
  %v1363 = vadd.f32 0.0, %v1362
  %1364 = vdwg.mxu0
  %1365 = vmatpush.msra.mxu0 0.0
  %1366 = vmatpush.msra.mxu0 0.0
  %1367 = vmatpush.msra.mxu0 0.0
  %1368 = vmatpush.msra.mxu0 0.0
  %1369 = vmatpush.msra.mxu0 0.0
  %1370 = vmatpush.msra.mxu0 0.0
  %1371 = vmatpush.msra.mxu0 0.0
  %1372 = vmatpush.msra.mxu0 0.0
  %1373 = vmatpush.msra.mxu0 0.0
  %1374 = vmatpush.msra.mxu0 0.0
  %1375 = vmatpush.msra.mxu0 0.0
  %1376 = vmatpush.msra.mxu0 0.0
  %1377 = vmatpush.msra.mxu0 %v1302
  %1378 = vmatpush.msra.mxu0 %v1300
  %1379 = vmatpush.msra.mxu0 %v1298
  %1380 = vmatpush.msra.mxu0 %v1296
  %1381 = vmatmul.f32.gmra.mxu0 %v1303
  %v1382 = vpop.f32.mrf.mxu0
  %v1383 = vadd.f32 %v1363, %v1382
  %1384 = vdwg.mxu0
  %v1386 = vsel %vm316, %v1221, 0
  %1388 = vmatpush.msra.mxu0 %v1252
  %1389 = vmatpush.msra.mxu0 %v1250
  %1390 = vmatpush.msra.mxu0 %v1248
  %1391 = vmatpush.msra.mxu0 %v1246
  %1392 = vmatpush.msra.mxu0 %v1244
  %1393 = vmatpush.msra.mxu0 %v1242
  %1394 = vmatpush.msra.mxu0 %v1240
  %1395 = vmatpush.msra.mxu0 %v1238
  %1396 = vmatpush.msra.mxu0 %v1236
  %1397 = vmatpush.msra.mxu0 %v1234
  %1398 = vmatpush.msra.mxu0 %v1232
  %1399 = vmatpush.msra.mxu0 %v1230
  %1400 = vmatpush.msra.mxu0 %v1228
  %1401 = vmatpush.msra.mxu0 %v1226
  %1402 = vmatpush.msra.mxu0 %v1224
  %1403 = vmatpush.msra.mxu0 %v1222
  %1404 = vmatmul.f32.gmra.mxu0 %v1220
  %v1405 = vpop.f32.mrf.mxu0
  %v1406 = vadd.f32 %v1343, %v1405
  %1407 = vdwg.mxu0
  %1408 = vmatpush.msra.mxu0 0.0
  %1409 = vmatpush.msra.mxu0 0.0
  %1410 = vmatpush.msra.mxu0 0.0
  %1411 = vmatpush.msra.mxu0 0.0
  %1412 = vmatpush.msra.mxu0 0.0
  %1413 = vmatpush.msra.mxu0 0.0
  %1414 = vmatpush.msra.mxu0 0.0
  %1415 = vmatpush.msra.mxu0 0.0
  %1416 = vmatpush.msra.mxu0 0.0
  %1417 = vmatpush.msra.mxu0 0.0
  %1418 = vmatpush.msra.mxu0 0.0
  %1419 = vmatpush.msra.mxu0 0.0
  %1420 = vmatpush.msra.mxu0 %v1260
  %1421 = vmatpush.msra.mxu0 %v1258
  %1422 = vmatpush.msra.mxu0 %v1256
  %1423 = vmatpush.msra.mxu0 %v1254
  %1424 = vmatmul.f32.gmra.mxu0 %v1386
  %v1425 = vpop.f32.mrf.mxu0
  %v1426 = vadd.f32 %v1406, %v1425
  %1427 = vdwg.mxu0
  %1428 = vmatpush.msra.mxu0 %v1253
  %1429 = vmatpush.msra.mxu0 %v1251
  %1430 = vmatpush.msra.mxu0 %v1249
  %1431 = vmatpush.msra.mxu0 %v1247
  %1432 = vmatpush.msra.mxu0 %v1245
  %1433 = vmatpush.msra.mxu0 %v1243
  %1434 = vmatpush.msra.mxu0 %v1241
  %1435 = vmatpush.msra.mxu0 %v1239
  %1436 = vmatpush.msra.mxu0 %v1237
  %1437 = vmatpush.msra.mxu0 %v1235
  %1438 = vmatpush.msra.mxu0 %v1233
  %1439 = vmatpush.msra.mxu0 %v1231
  %1440 = vmatpush.msra.mxu0 %v1229
  %1441 = vmatpush.msra.mxu0 %v1227
  %1442 = vmatpush.msra.mxu0 %v1225
  %1443 = vmatpush.msra.mxu0 %v1223
  %1444 = vmatmul.f32.gmra.mxu0 %v1220
  %v1445 = vpop.f32.mrf.mxu0
  %v1446 = vadd.f32 %v1383, %v1445
  %1447 = vdwg.mxu0
  %1448 = vmatpush.msra.mxu0 0.0
  %1449 = vmatpush.msra.mxu0 0.0
  %1450 = vmatpush.msra.mxu0 0.0
  %1451 = vmatpush.msra.mxu0 0.0
  %1452 = vmatpush.msra.mxu0 0.0
  %1453 = vmatpush.msra.mxu0 0.0
  %1454 = vmatpush.msra.mxu0 0.0
  %1455 = vmatpush.msra.mxu0 0.0
  %1456 = vmatpush.msra.mxu0 0.0
  %1457 = vmatpush.msra.mxu0 0.0
  %1458 = vmatpush.msra.mxu0 0.0
  %1459 = vmatpush.msra.mxu0 0.0
  %1460 = vmatpush.msra.mxu0 %v1261
  %1461 = vmatpush.msra.mxu0 %v1259
  %1462 = vmatpush.msra.mxu0 %v1257
  %1463 = vmatpush.msra.mxu0 %v1255
  %1464 = vmatmul.f32.gmra.mxu0 %v1386
  %v1465 = vpop.f32.mrf.mxu0
  %v1466 = vadd.f32 %v1446, %v1465
  %1467 = vdwg.mxu0
  %s1468 = scalar_lea.vmem %s16, 640
  %v1469 = vld [vmem:[%s1468] sm:$0xff]
  %v1470 = vld [vmem:[%s1468 + $0x8] sm:$0xff]
  %v1471 = vld [vmem:[%s1468 + $0x10] sm:$0xff]
  %v1472 = vld [vmem:[%s1468 + $0x18] sm:$0xff]
  %v1473 = vld [vmem:[%s1468 + $0x20] sm:$0xff]
  %v1474 = vld [vmem:[%s1468 + $0x28] sm:$0xff]
  %v1475 = vld [vmem:[%s1468 + $0x30] sm:$0xff]
  %v1476 = vld [vmem:[%s1468 + $0x38] sm:$0xff]
  %v1477 = vld [vmem:[%s1468 + $0x40] sm:$0xff]
  %v1478 = vld [vmem:[%s1468 + $0x48] sm:$0xff]
  %v1479 = vld [vmem:[%s1468 + $0x50] sm:$0xff]
  %v1480 = vld [vmem:[%s1468 + $0x58] sm:$0xff]
  %v1481 = vld [vmem:[%s1468 + $0x60] sm:$0xff]
  %v1482 = vld [vmem:[%s1468 + $0x68] sm:$0xff]
  %v1483 = vld [vmem:[%s1468 + $0x70] sm:$0xff]
  %v1484 = vld [vmem:[%s1468 + $0x78] sm:$0xff]
  %v1485 = vld [vmem:[%s1468 + $0x80] sm:$0xff]
  %v1486 = vld [vmem:[%s1468 + $0x88] sm:$0xff]
  %v1487 = vld [vmem:[%s1468 + $0x90] sm:$0xff]
  %v1488 = vld [vmem:[%s1468 + $0x98] sm:$0xff]
  %v1489 = vld [vmem:[%s1468 + $0xa0] sm:$0xff]
  %v1490 = vld [vmem:[%s1468 + $0xa8] sm:$0xff]
  %v1491 = vld [vmem:[%s1468 + $0xb0] sm:$0xff]
  %v1492 = vld [vmem:[%s1468 + $0xb8] sm:$0xff]
  %v1493 = vld [vmem:[%s1468 + $0xc0] sm:$0xff]
  %v1494 = vld [vmem:[%s1468 + $0xc8] sm:$0xff]
  %v1495 = vld [vmem:[%s1468 + $0xd0] sm:$0xff]
  %v1496 = vld [vmem:[%s1468 + $0xd8] sm:$0xff]
  %v1497 = vld [vmem:[%s1468 + $0xe0] sm:$0xff]
  %v1498 = vld [vmem:[%s1468 + $0xe8] sm:$0xff]
  %v1499 = vld [vmem:[%s1468 + $0xf0] sm:$0xff]
  %v1500 = vld [vmem:[%s1468 + $0xf8] sm:$0xff]
  %v1501 = vld [vmem:[%s1468 + $0x100] sm:$0xff]
  %v1502 = vld [vmem:[%s1468 + $0x108] sm:$0xff]
  %v1503 = vld [vmem:[%s1468 + $0x110] sm:$0xff]
  %v1504 = vld [vmem:[%s1468 + $0x118] sm:$0xff]
  %v1505 = vld [vmem:[%s1468 + $0x120] sm:$0xff]
  %v1506 = vld [vmem:[%s1468 + $0x128] sm:$0xff]
  %v1507 = vld [vmem:[%s1468 + $0x130] sm:$0xff]
  %v1508 = vld [vmem:[%s1468 + $0x138] sm:$0xff]
  %v1510 = vsel %vm316, %v1213, 0
  %1512 = vmatpush.msra.mxu0 %v1499
  %1513 = vmatpush.msra.mxu0 %v1497
  %1514 = vmatpush.msra.mxu0 %v1495
  %1515 = vmatpush.msra.mxu0 %v1493
  %1516 = vmatpush.msra.mxu0 %v1491
  %1517 = vmatpush.msra.mxu0 %v1489
  %1518 = vmatpush.msra.mxu0 %v1487
  %1519 = vmatpush.msra.mxu0 %v1485
  %1520 = vmatpush.msra.mxu0 %v1483
  %1521 = vmatpush.msra.mxu0 %v1481
  %1522 = vmatpush.msra.mxu0 %v1479
  %1523 = vmatpush.msra.mxu0 %v1477
  %1524 = vmatpush.msra.mxu0 %v1475
  %1525 = vmatpush.msra.mxu0 %v1473
  %1526 = vmatpush.msra.mxu0 %v1471
  %1527 = vmatpush.msra.mxu0 %v1469
  %1528 = vmatmul.f32.gmra.mxu0 %v1212
  %v1529 = vpop.f32.mrf.mxu0
  %v1530 = vadd.f32 0.0, %v1529
  %1531 = vdwg.mxu0
  %1532 = vmatpush.msra.mxu0 0.0
  %1533 = vmatpush.msra.mxu0 0.0
  %1534 = vmatpush.msra.mxu0 0.0
  %1535 = vmatpush.msra.mxu0 0.0
  %1536 = vmatpush.msra.mxu0 0.0
  %1537 = vmatpush.msra.mxu0 0.0
  %1538 = vmatpush.msra.mxu0 0.0
  %1539 = vmatpush.msra.mxu0 0.0
  %1540 = vmatpush.msra.mxu0 0.0
  %1541 = vmatpush.msra.mxu0 0.0
  %1542 = vmatpush.msra.mxu0 0.0
  %1543 = vmatpush.msra.mxu0 0.0
  %1544 = vmatpush.msra.mxu0 %v1507
  %1545 = vmatpush.msra.mxu0 %v1505
  %1546 = vmatpush.msra.mxu0 %v1503
  %1547 = vmatpush.msra.mxu0 %v1501
  %1548 = vmatmul.f32.gmra.mxu0 %v1510
  %v1549 = vpop.f32.mrf.mxu0
  %v1550 = vadd.f32 %v1530, %v1549
  %1551 = vdwg.mxu0
  %1552 = vmatpush.msra.mxu0 %v1500
  %1553 = vmatpush.msra.mxu0 %v1498
  %1554 = vmatpush.msra.mxu0 %v1496
  %1555 = vmatpush.msra.mxu0 %v1494
  %1556 = vmatpush.msra.mxu0 %v1492
  %1557 = vmatpush.msra.mxu0 %v1490
  %1558 = vmatpush.msra.mxu0 %v1488
  %1559 = vmatpush.msra.mxu0 %v1486
  %1560 = vmatpush.msra.mxu0 %v1484
  %1561 = vmatpush.msra.mxu0 %v1482
  %1562 = vmatpush.msra.mxu0 %v1480
  %1563 = vmatpush.msra.mxu0 %v1478
  %1564 = vmatpush.msra.mxu0 %v1476
  %1565 = vmatpush.msra.mxu0 %v1474
  %1566 = vmatpush.msra.mxu0 %v1472
  %1567 = vmatpush.msra.mxu0 %v1470
  %1568 = vmatmul.f32.gmra.mxu0 %v1212
  %v1569 = vpop.f32.mrf.mxu0
  %v1570 = vadd.f32 0.0, %v1569
  %1571 = vdwg.mxu0
  %1572 = vmatpush.msra.mxu0 0.0
  %1573 = vmatpush.msra.mxu0 0.0
  %1574 = vmatpush.msra.mxu0 0.0
  %1575 = vmatpush.msra.mxu0 0.0
  %1576 = vmatpush.msra.mxu0 0.0
  %1577 = vmatpush.msra.mxu0 0.0
  %1578 = vmatpush.msra.mxu0 0.0
  %1579 = vmatpush.msra.mxu0 0.0
  %1580 = vmatpush.msra.mxu0 0.0
  %1581 = vmatpush.msra.mxu0 0.0
  %1582 = vmatpush.msra.mxu0 0.0
  %1583 = vmatpush.msra.mxu0 0.0
  %1584 = vmatpush.msra.mxu0 %v1508
  %1585 = vmatpush.msra.mxu0 %v1506
  %1586 = vmatpush.msra.mxu0 %v1504
  %1587 = vmatpush.msra.mxu0 %v1502
  %1588 = vmatmul.f32.gmra.mxu0 %v1510
  %v1589 = vpop.f32.mrf.mxu0
  %v1590 = vadd.f32 %v1570, %v1589
  %1591 = vdwg.mxu0
  %v1592 = vadd.f32 %v1426, %v1550
  %v1593 = vadd.f32 %v1466, %v1590
  %v1595 = vperm.slane %v1201, 0
  %v1596 = vperm.slane %v1201, 1
  %v1599 = vadd.f32 %v1592, %v1595
  %v1600 = vadd.f32 %v1593, %v1596
  %v1601 = vadd.f32 %v1599, %v1202
  %v1602 = vadd.f32 %v1600, %v1203
  %v1605 = vrot.slane %v1602, 4
  %v1606 = vsel %vm129, %v1601, %v1605
  %vm1608 = vcmask 261124
  %vm1609 = vmor %vm1608, %vm129
  %1610 = vst.msk [vmem:[%s18] sm:$0xff] %vm1609, %v1606
  // Predicated region
  $region74: #{social_stgcnn_forward.1} parent=0 // pred_check
    _
  $region75: #{social_stgcnn_forward.1} parent=0 // pred_check_branch
    %1612 = sbr.rel (0) target = $region77
  $region76: #{social_stgcnn_forward.1} parent=0 // pred_region
    _
  $region77: #{social_stgcnn_forward.1} parent=0 // pred_fallthru
    _
  // Predicated region
  $region78: #{social_stgcnn_forward.1} parent=0 // pred_check
    _
  $region79: #{social_stgcnn_forward.1} parent=0 // pred_check_branch
    %1614 = sbr.rel (0) target = $region81
  $region80: #{social_stgcnn_forward.1} parent=0 // pred_region
    _
  $region81: #{social_stgcnn_forward.1} parent=0 // pred_fallthru
    _

</llo_original>
